<compile_context>
chip_gen: v7x
topology: tpu7x:2x2x1
jax: 0.10.0
libtpu: 0.0.40
codegen_flags: <defaults>
</compile_context>

<pallas_src>
import functools
import math

import jax
import jax.numpy as jnp
from jax import lax
from jax.experimental import pallas as pl
from jax.experimental.pallas import tpu as pltpu


def _embedding_loss_kernel(ind_ref,    # SMEM (num_tiles, TILE) int32  (scalar prefetch, flat row idx)
                           feat_hbm,   # ANY  (B*HW, E) f32            (stays in HBM)
                           mask_ref,   # VMEM (TILE, 1) f32
                           tgt_ref,    # VMEM (TILE, 1) int32
                           wt_ref,     # VMEM (E, nID) f32             classifier weight, transposed
                           b_ref,      # VMEM (1, nID) f32             classifier bias
                           out_ref,    # VMEM (TILE, 2) f32            [ce * valid ; valid]
                           gbuf,       # VMEM (TILE, E) f32            gather scratch
                           sems,       # DMA semaphores (TILE,)
                           *, emb_scale, nid_chunk):
    t = pl.program_id(0)
    TILE, E = gbuf.shape
    nID = wt_ref.shape[1]

    # ---- gather: all TILE contiguous (1, E) row DMAs in flight, then wait once ---------------
    copies = []
    for k in range(TILE):                              # TILE is small & static -> static unroll
        idx = ind_ref[t, k]                            # pre-clamped flat row index (b*HW + ind)
        cp = pltpu.make_async_copy(feat_hbm.at[pl.ds(idx, 1), :],
                                   gbuf.at[pl.ds(k, 1), :],
                                   sems.at[k])
        cp.start()
        copies.append(cp)
    for cp in copies:
        cp.wait()

    g = gbuf[...]                                      # (TILE, E)  slot-major, E lane-dense
    msk = mask_ref[...]                                # (TILE, 1)
    tgt = tgt_ref[...]                                 # (TILE, 1) int32

    # ---- emb_scale * F.normalize(x, dim=1)  (eps = 1e-12, PyTorch default; eps^2 under rsqrt)
    sumsq = jnp.sum(g * g, axis=-1, keepdims=True)                      # (TILE, 1)
    x = g * (emb_scale * lax.rsqrt(jnp.maximum(sumsq, 1e-24)))          # (TILE, E)

    # ---- classifier + online log-sum-exp over nID chunks (nID lane-dense) --------------------
    run_max = jnp.full((TILE, 1), -jnp.inf, dtype=jnp.float32)
    run_sum = jnp.zeros((TILE, 1), dtype=jnp.float32)
    run_sel = jnp.zeros((TILE, 1), dtype=jnp.float32)
    for c0 in range(0, nID, nid_chunk):                # static chunk loop (1 iter at toy nID)
        c1 = min(c0 + nid_chunk, nID)
        logits = jnp.dot(x, wt_ref[:, c0:c1],
                         preferred_element_type=jnp.float32) + b_ref[:, c0:c1]   # (TILE, nc)
        cmax = jnp.max(logits, axis=-1, keepdims=True)
        new_max = jnp.maximum(run_max, cmax)
        alpha = jnp.exp(run_max - new_max)
        run_sum = alpha * run_sum + jnp.sum(jnp.exp(logits - new_max),
                                            axis=-1, keepdims=True)
        cols = lax.broadcasted_iota(jnp.int32, logits.shape, 1) + c0
        run_sel = run_sel + jnp.sum(jnp.where(cols == tgt, logits, 0.0),
                                    axis=-1, keepdims=True)
        run_max = new_max

    # ---- cross entropy with ignore_index = -1, per slot ---------------------------------------
    ce = (run_max + jnp.log(run_sum)) - run_sel                         # (TILE, 1)
    valid = jnp.logical_and(msk > 0.0, tgt >= 0).astype(jnp.float32)    # (TILE, 1)

    out_ref[:, 0:1] = ce * valid                       # per-tile partial numerator
    out_ref[:, 1:2] = valid                            # per-tile partial denominator


def embedding_loss(output, mask, ind, target, cls_w, cls_b):
    """EmbeddingLoss forward (CrossEntropy branch).

    output: (B, emb_dim, H, W) NCHW id-embedding map
    mask:   (B, K) 0/1, ind: (B, K) int spatial indices, target: (B, K) int IDs (-1 = ignore)
    cls_w:  (nID, emb_dim), cls_b: (nID,)  -- the nn.Linear classifier parameters
    """
    B, E, H, W = output.shape
    K = ind.shape[1]
    HW = H * W
    nID = cls_w.shape[0]
    emb_scale = math.sqrt(2.0) * math.log(nID - 1)

    # ---- slot tiling over all B*K gather slots -------------------------------------------------
    BK = B * K
    TILE = min(128, ((BK + 7) // 8) * 8)               # sublane-aligned slot tile, <=128
    num_tiles = -(-BK // TILE)
    padded = num_tiles * TILE

    # Flat NHWC view: one streaming transpose, then every gathered embedding is a contiguous row.
    feat = jnp.transpose(output, (0, 2, 3, 1)).reshape(B * HW, E).astype(jnp.float32)

    # Flat, clamped gather indices + padded mask / target (pad slots contribute valid = 0).
    flat_ind = (jnp.arange(B, dtype=jnp.int32)[:, None] * HW
                + jnp.clip(ind.astype(jnp.int32), 0, HW - 1)).reshape(BK)
    flat_mask = mask.astype(jnp.float32).reshape(BK)
    flat_tgt = target.astype(jnp.int32).reshape(BK)
    pad = padded - BK
    if pad:
        flat_ind = jnp.concatenate([flat_ind, jnp.zeros((pad,), jnp.int32)])
        flat_mask = jnp.concatenate([flat_mask, jnp.zeros((pad,), jnp.float32)])
        flat_tgt = jnp.concatenate([flat_tgt, jnp.full((pad,), -1, jnp.int32)])
    ind2 = flat_ind.reshape(num_tiles, TILE)
    mask3 = flat_mask.reshape(num_tiles, TILE, 1)
    tgt3 = flat_tgt.reshape(num_tiles, TILE, 1)

    wt = cls_w.astype(jnp.float32).T                   # (E, nID): logits lane-dense in nID
    b2 = cls_b.astype(jnp.float32).reshape(1, nID)

    nid_chunk = min(nID, 1024)                         # online-LSE chunk width over nID
    kernel = functools.partial(_embedding_loss_kernel,
                               emb_scale=emb_scale, nid_chunk=nid_chunk)

    part = pl.pallas_call(
        kernel,
        out_shape=jax.ShapeDtypeStruct((num_tiles, TILE, 2), jnp.float32),
        grid_spec=pltpu.PrefetchScalarGridSpec(
            num_scalar_prefetch=1,                     # flat gather indices -> SMEM
            grid=(num_tiles,),
            in_specs=[
                pl.BlockSpec(memory_space=pl.ANY),                            # feat stays in HBM
                pl.BlockSpec((None, TILE, 1), lambda t, ind_ref: (t, 0, 0)),  # mask
                pl.BlockSpec((None, TILE, 1), lambda t, ind_ref: (t, 0, 0)),  # target
                pl.BlockSpec((E, nID), lambda t, ind_ref: (0, 0)),            # classifier W^T
                pl.BlockSpec((1, nID), lambda t, ind_ref: (0, 0)),            # classifier bias
            ],
            out_specs=pl.BlockSpec((None, TILE, 2), lambda t, ind_ref: (t, 0, 0)),
            scratch_shapes=[
                pltpu.VMEM((TILE, E), jnp.float32),     # gather scratch (DMA lands row-by-row)
                pltpu.SemaphoreType.DMA((TILE,)),       # one semaphore per gathered row
            ],
        ),
        compiler_params=pltpu.CompilerParams(
            dimension_semantics=("parallel",)),        # slot tiles independent -> both TCs
    )(ind2, feat, mask3, tgt3, wt, b2)

    # Final reduction + normalization in plain JAX (matches CE 'mean' over non-ignored entries).
    num = jnp.sum(part[..., 0])
    den = jnp.sum(part[..., 1])
    return num / den

    # TODO(synk): the 'focal' (sigmoid_focal_loss) branch of EmbeddingLoss is a config option and
    # is not implemented here; only the default CrossEntropy(ignore_index=-1) path is provided.


def _reference(output, mask, ind, target, cls_w, cls_b):
    """Pure-JAX reference mirroring the PyTorch module (CrossEntropy branch)."""
    B, E, H, W = output.shape
    K = ind.shape[1]
    nID = cls_w.shape[0]
    emb_scale = math.sqrt(2.0) * math.log(nID - 1)
    feat = jnp.transpose(output, (0, 2, 3, 1)).reshape(B, H * W, E)
    gidx = jnp.broadcast_to(ind[:, :, None].astype(jnp.int32), (B, K, E))
    id_head = jnp.take_along_axis(feat, gidx, axis=1).reshape(B * K, E)
    msk = mask.reshape(B * K)
    tgt = target.reshape(B * K).astype(jnp.int32)
    norm = jnp.sqrt(jnp.sum(id_head * id_head, axis=1, keepdims=True))
    x = emb_scale * id_head / jnp.maximum(norm, 1e-12)
    logits = jnp.dot(x, cls_w.T, precision=lax.Precision.HIGHEST) + cls_b[None, :]
    mmax = jnp.max(logits, axis=1, keepdims=True)
    lse = mmax[:, 0] + jnp.log(jnp.sum(jnp.exp(logits - mmax), axis=1))
    sel = jnp.take_along_axis(logits, jnp.clip(tgt, 0, nID - 1)[:, None], axis=1)[:, 0]
    valid = ((msk > 0) & (tgt >= 0)).astype(jnp.float32)
    return jnp.sum((lse - sel) * valid) / jnp.sum(valid)


if __name__ == "__main__":
    B, E, H, W, K, nID = 2, 32, 16, 16, 8, 40
    key = jax.random.PRNGKey(0)
    k1, k2, k3, k4, k5, k6, k7 = jax.random.split(key, 7)

    output = jax.random.normal(k1, (B, E, H, W), dtype=jnp.float32)          # NCHW embedding map
    ind = jax.random.randint(k2, (B, K), 0, H * W, dtype=jnp.int32)          # gather indices
    mask = (jax.random.uniform(k3, (B, K)) > 0.3).astype(jnp.float32)        # 0/1 object mask
    target = jax.random.randint(k4, (B, K), 0, nID, dtype=jnp.int32)         # identity labels
    target = jnp.where(jax.random.uniform(k5, (B, K)) < 0.2, -1, target)     # some ignore_index
    mask = mask.at[:, 0].set(1.0)                                            # ensure >=1 valid
    target = target.at[:, 0].set(3)
    cls_w = 0.01 * jax.random.normal(k6, (nID, E), dtype=jnp.float32)        # nn.Linear weight
    cls_b = 0.1 * jax.random.normal(k7, (nID,), dtype=jnp.float32)           # nn.Linear bias

    loss = embedding_loss(output, mask, ind, target, cls_w, cls_b)
    loss = jax.block_until_ready(loss)

    ref = _reference(output, mask, ind, target, cls_w, cls_b)
    if not jnp.allclose(loss, ref, rtol=1e-4, atol=1e-4):
        raise AssertionError(f"mismatch: pallas={loss} ref={ref}")

    print("KERNEL_OK")
</pallas_src>

<mosaic_0001>
module attributes {stable_mosaic.version = 11 : i64} {
  func.func @_embedding_loss_kernel(%arg0: i32, %arg1: memref<1x16xi32, #tpu.memory_space<smem>>, %arg2: memref<512x32xf32, #tpu.memory_space<any>>, %arg3: memref<1x16x1xf32, #tpu.memory_space<vmem>>, %arg4: memref<1x16x1xi32, #tpu.memory_space<vmem>>, %arg5: memref<32x40xf32, #tpu.memory_space<vmem>>, %arg6: memref<1x40xf32, #tpu.memory_space<vmem>>, %arg7: memref<1x16x2xf32, #tpu.memory_space<vmem>>, %arg8: memref<16x32xf32, #tpu.memory_space<vmem>>, %arg9: memref<16x!tpu.dma_semaphore, #tpu.memory_space<semaphore_mem>>) attributes {dimension_semantics = [#tpu.dimension_semantics<parallel>], iteration_bounds = array<i64: 1>, scalar_prefetch = 1 : i64, scratch_operands = 2 : i64, tpu.core_type = #tpu.core_type<tc>, window_params = [{}, {transform_indices = @transform_1, window_bounds = array<i64: 1, 16, 1>}, {transform_indices = @transform_2, window_bounds = array<i64: 1, 16, 1>}, {pipeline_mode = #tpu.pipeline_mode<synchronous>, transform_indices = @transform_3, window_bounds = array<i64: 32, 40>}, {pipeline_mode = #tpu.pipeline_mode<synchronous>, transform_indices = @transform_4, window_bounds = array<i64: 1, 40>}, {transform_indices = @transform_5, window_bounds = array<i64: 1, 16, 2>}]} {
    %0 = arith.index_cast %arg0 : i32 to index
    %c0 = arith.constant 0 : index
    %1 = memref.load %arg1[%0, %c0] : memref<1x16xi32, #tpu.memory_space<smem>>
    %c0_i32 = arith.constant 0 : i32
    %c0_i32_0 = arith.constant 0 : i32
    %2 = tpu.memref_slice %arg2[%1, %c0_i32_0] : memref<512x32xf32, #tpu.memory_space<any>> -> memref<1x32xf32, #tpu.memory_space<any>>
    %c0_i32_1 = arith.constant 0 : i32
    %c0_i32_2 = arith.constant 0 : i32
    %3 = tpu.memref_slice %arg8[%c0_i32_1, %c0_i32_2] : memref<16x32xf32, #tpu.memory_space<vmem>> -> memref<1x32xf32, #tpu.memory_space<vmem>>
    %4 = tpu.memref_slice %arg9[%c0_i32] : memref<16x!tpu.dma_semaphore, #tpu.memory_space<semaphore_mem>> -> memref<1x!tpu.dma_semaphore, #tpu.memory_space<semaphore_mem>>
    %5 = tpu.memref_squeeze %4 : memref<1x!tpu.dma_semaphore, #tpu.memory_space<semaphore_mem>> -> memref<!tpu.dma_semaphore, #tpu.memory_space<semaphore_mem>>
    tpu.enqueue_dma source(%2 : memref<1x32xf32, #tpu.memory_space<any>>) target(%3 : memref<1x32xf32, #tpu.memory_space<vmem>>) target_semaphore(%5 : memref<!tpu.dma_semaphore, #tpu.memory_space<semaphore_mem>>)
    %6 = arith.index_cast %arg0 : i32 to index
    %c1 = arith.constant 1 : index
    %7 = memref.load %arg1[%6, %c1] : memref<1x16xi32, #tpu.memory_space<smem>>
    %c1_i32 = arith.constant 1 : i32
    %c0_i32_3 = arith.constant 0 : i32
    %8 = tpu.memref_slice %arg2[%7, %c0_i32_3] : memref<512x32xf32, #tpu.memory_space<any>> -> memref<1x32xf32, #tpu.memory_space<any>>
    %c1_i32_4 = arith.constant 1 : i32
    %c0_i32_5 = arith.constant 0 : i32
    %9 = tpu.memref_slice %arg8[%c1_i32_4, %c0_i32_5] : memref<16x32xf32, #tpu.memory_space<vmem>> -> memref<1x32xf32, #tpu.memory_space<vmem>>
    %10 = tpu.memref_slice %arg9[%c1_i32] : memref<16x!tpu.dma_semaphore, #tpu.memory_space<semaphore_mem>> -> memref<1x!tpu.dma_semaphore, #tpu.memory_space<semaphore_mem>>
    %11 = tpu.memref_squeeze %10 : memref<1x!tpu.dma_semaphore, #tpu.memory_space<semaphore_mem>> -> memref<!tpu.dma_semaphore, #tpu.memory_space<semaphore_mem>>
    tpu.enqueue_dma source(%8 : memref<1x32xf32, #tpu.memory_space<any>>) target(%9 : memref<1x32xf32, #tpu.memory_space<vmem>>) target_semaphore(%11 : memref<!tpu.dma_semaphore, #tpu.memory_space<semaphore_mem>>)
    %12 = arith.index_cast %arg0 : i32 to index
    %c2 = arith.constant 2 : index
    %13 = memref.load %arg1[%12, %c2] : memref<1x16xi32, #tpu.memory_space<smem>>
    %c2_i32 = arith.constant 2 : i32
    %c0_i32_6 = arith.constant 0 : i32
    %14 = tpu.memref_slice %arg2[%13, %c0_i32_6] : memref<512x32xf32, #tpu.memory_space<any>> -> memref<1x32xf32, #tpu.memory_space<any>>
    %c2_i32_7 = arith.constant 2 : i32
    %c0_i32_8 = arith.constant 0 : i32
    %15 = tpu.memref_slice %arg8[%c2_i32_7, %c0_i32_8] : memref<16x32xf32, #tpu.memory_space<vmem>> -> memref<1x32xf32, #tpu.memory_space<vmem>>
    %16 = tpu.memref_slice %arg9[%c2_i32] : memref<16x!tpu.dma_semaphore, #tpu.memory_space<semaphore_mem>> -> memref<1x!tpu.dma_semaphore, #tpu.memory_space<semaphore_mem>>
    %17 = tpu.memref_squeeze %16 : memref<1x!tpu.dma_semaphore, #tpu.memory_space<semaphore_mem>> -> memref<!tpu.dma_semaphore, #tpu.memory_space<semaphore_mem>>
    tpu.enqueue_dma source(%14 : memref<1x32xf32, #tpu.memory_space<any>>) target(%15 : memref<1x32xf32, #tpu.memory_space<vmem>>) target_semaphore(%17 : memref<!tpu.dma_semaphore, #tpu.memory_space<semaphore_mem>>)
    %18 = arith.index_cast %arg0 : i32 to index
    %c3 = arith.constant 3 : index
    %19 = memref.load %arg1[%18, %c3] : memref<1x16xi32, #tpu.memory_space<smem>>
    %c3_i32 = arith.constant 3 : i32
    %c0_i32_9 = arith.constant 0 : i32
    %20 = tpu.memref_slice %arg2[%19, %c0_i32_9] : memref<512x32xf32, #tpu.memory_space<any>> -> memref<1x32xf32, #tpu.memory_space<any>>
    %c3_i32_10 = arith.constant 3 : i32
    %c0_i32_11 = arith.constant 0 : i32
    %21 = tpu.memref_slice %arg8[%c3_i32_10, %c0_i32_11] : memref<16x32xf32, #tpu.memory_space<vmem>> -> memref<1x32xf32, #tpu.memory_space<vmem>>
    %22 = tpu.memref_slice %arg9[%c3_i32] : memref<16x!tpu.dma_semaphore, #tpu.memory_space<semaphore_mem>> -> memref<1x!tpu.dma_semaphore, #tpu.memory_space<semaphore_mem>>
    %23 = tpu.memref_squeeze %22 : memref<1x!tpu.dma_semaphore, #tpu.memory_space<semaphore_mem>> -> memref<!tpu.dma_semaphore, #tpu.memory_space<semaphore_mem>>
    tpu.enqueue_dma source(%20 : memref<1x32xf32, #tpu.memory_space<any>>) target(%21 : memref<1x32xf32, #tpu.memory_space<vmem>>) target_semaphore(%23 : memref<!tpu.dma_semaphore, #tpu.memory_space<semaphore_mem>>)
    %24 = arith.index_cast %arg0 : i32 to index
    %c4 = arith.constant 4 : index
    %25 = memref.load %arg1[%24, %c4] : memref<1x16xi32, #tpu.memory_space<smem>>
    %c4_i32 = arith.constant 4 : i32
    %c0_i32_12 = arith.constant 0 : i32
    %26 = tpu.memref_slice %arg2[%25, %c0_i32_12] : memref<512x32xf32, #tpu.memory_space<any>> -> memref<1x32xf32, #tpu.memory_space<any>>
    %c4_i32_13 = arith.constant 4 : i32
    %c0_i32_14 = arith.constant 0 : i32
    %27 = tpu.memref_slice %arg8[%c4_i32_13, %c0_i32_14] : memref<16x32xf32, #tpu.memory_space<vmem>> -> memref<1x32xf32, #tpu.memory_space<vmem>>
    %28 = tpu.memref_slice %arg9[%c4_i32] : memref<16x!tpu.dma_semaphore, #tpu.memory_space<semaphore_mem>> -> memref<1x!tpu.dma_semaphore, #tpu.memory_space<semaphore_mem>>
    %29 = tpu.memref_squeeze %28 : memref<1x!tpu.dma_semaphore, #tpu.memory_space<semaphore_mem>> -> memref<!tpu.dma_semaphore, #tpu.memory_space<semaphore_mem>>
    tpu.enqueue_dma source(%26 : memref<1x32xf32, #tpu.memory_space<any>>) target(%27 : memref<1x32xf32, #tpu.memory_space<vmem>>) target_semaphore(%29 : memref<!tpu.dma_semaphore, #tpu.memory_space<semaphore_mem>>)
    %30 = arith.index_cast %arg0 : i32 to index
    %c5 = arith.constant 5 : index
    %31 = memref.load %arg1[%30, %c5] : memref<1x16xi32, #tpu.memory_space<smem>>
    %c5_i32 = arith.constant 5 : i32
    %c0_i32_15 = arith.constant 0 : i32
    %32 = tpu.memref_slice %arg2[%31, %c0_i32_15] : memref<512x32xf32, #tpu.memory_space<any>> -> memref<1x32xf32, #tpu.memory_space<any>>
    %c5_i32_16 = arith.constant 5 : i32
    %c0_i32_17 = arith.constant 0 : i32
    %33 = tpu.memref_slice %arg8[%c5_i32_16, %c0_i32_17] : memref<16x32xf32, #tpu.memory_space<vmem>> -> memref<1x32xf32, #tpu.memory_space<vmem>>
    %34 = tpu.memref_slice %arg9[%c5_i32] : memref<16x!tpu.dma_semaphore, #tpu.memory_space<semaphore_mem>> -> memref<1x!tpu.dma_semaphore, #tpu.memory_space<semaphore_mem>>
    %35 = tpu.memref_squeeze %34 : memref<1x!tpu.dma_semaphore, #tpu.memory_space<semaphore_mem>> -> memref<!tpu.dma_semaphore, #tpu.memory_space<semaphore_mem>>
    tpu.enqueue_dma source(%32 : memref<1x32xf32, #tpu.memory_space<any>>) target(%33 : memref<1x32xf32, #tpu.memory_space<vmem>>) target_semaphore(%35 : memref<!tpu.dma_semaphore, #tpu.memory_space<semaphore_mem>>)
    %36 = arith.index_cast %arg0 : i32 to index
    %c6 = arith.constant 6 : index
    %37 = memref.load %arg1[%36, %c6] : memref<1x16xi32, #tpu.memory_space<smem>>
    %c6_i32 = arith.constant 6 : i32
    %c0_i32_18 = arith.constant 0 : i32
    %38 = tpu.memref_slice %arg2[%37, %c0_i32_18] : memref<512x32xf32, #tpu.memory_space<any>> -> memref<1x32xf32, #tpu.memory_space<any>>
    %c6_i32_19 = arith.constant 6 : i32
    %c0_i32_20 = arith.constant 0 : i32
    %39 = tpu.memref_slice %arg8[%c6_i32_19, %c0_i32_20] : memref<16x32xf32, #tpu.memory_space<vmem>> -> memref<1x32xf32, #tpu.memory_space<vmem>>
    %40 = tpu.memref_slice %arg9[%c6_i32] : memref<16x!tpu.dma_semaphore, #tpu.memory_space<semaphore_mem>> -> memref<1x!tpu.dma_semaphore, #tpu.memory_space<semaphore_mem>>
    %41 = tpu.memref_squeeze %40 : memref<1x!tpu.dma_semaphore, #tpu.memory_space<semaphore_mem>> -> memref<!tpu.dma_semaphore, #tpu.memory_space<semaphore_mem>>
    tpu.enqueue_dma source(%38 : memref<1x32xf32, #tpu.memory_space<any>>) target(%39 : memref<1x32xf32, #tpu.memory_space<vmem>>) target_semaphore(%41 : memref<!tpu.dma_semaphore, #tpu.memory_space<semaphore_mem>>)
    %42 = arith.index_cast %arg0 : i32 to index
    %c7 = arith.constant 7 : index
    %43 = memref.load %arg1[%42, %c7] : memref<1x16xi32, #tpu.memory_space<smem>>
    %c7_i32 = arith.constant 7 : i32
    %c0_i32_21 = arith.constant 0 : i32
    %44 = tpu.memref_slice %arg2[%43, %c0_i32_21] : memref<512x32xf32, #tpu.memory_space<any>> -> memref<1x32xf32, #tpu.memory_space<any>>
    %c7_i32_22 = arith.constant 7 : i32
    %c0_i32_23 = arith.constant 0 : i32
    %45 = tpu.memref_slice %arg8[%c7_i32_22, %c0_i32_23] : memref<16x32xf32, #tpu.memory_space<vmem>> -> memref<1x32xf32, #tpu.memory_space<vmem>>
    %46 = tpu.memref_slice %arg9[%c7_i32] : memref<16x!tpu.dma_semaphore, #tpu.memory_space<semaphore_mem>> -> memref<1x!tpu.dma_semaphore, #tpu.memory_space<semaphore_mem>>
    %47 = tpu.memref_squeeze %46 : memref<1x!tpu.dma_semaphore, #tpu.memory_space<semaphore_mem>> -> memref<!tpu.dma_semaphore, #tpu.memory_space<semaphore_mem>>
    tpu.enqueue_dma source(%44 : memref<1x32xf32, #tpu.memory_space<any>>) target(%45 : memref<1x32xf32, #tpu.memory_space<vmem>>) target_semaphore(%47 : memref<!tpu.dma_semaphore, #tpu.memory_space<semaphore_mem>>)
    %48 = arith.index_cast %arg0 : i32 to index
    %c8 = arith.constant 8 : index
    %49 = memref.load %arg1[%48, %c8] : memref<1x16xi32, #tpu.memory_space<smem>>
    %c8_i32 = arith.constant 8 : i32
    %c0_i32_24 = arith.constant 0 : i32
    %50 = tpu.memref_slice %arg2[%49, %c0_i32_24] : memref<512x32xf32, #tpu.memory_space<any>> -> memref<1x32xf32, #tpu.memory_space<any>>
    %c8_i32_25 = arith.constant 8 : i32
    %c0_i32_26 = arith.constant 0 : i32
    %51 = tpu.memref_slice %arg8[%c8_i32_25, %c0_i32_26] : memref<16x32xf32, #tpu.memory_space<vmem>> -> memref<1x32xf32, #tpu.memory_space<vmem>>
    %52 = tpu.memref_slice %arg9[%c8_i32] : memref<16x!tpu.dma_semaphore, #tpu.memory_space<semaphore_mem>> -> memref<1x!tpu.dma_semaphore, #tpu.memory_space<semaphore_mem>>
    %53 = tpu.memref_squeeze %52 : memref<1x!tpu.dma_semaphore, #tpu.memory_space<semaphore_mem>> -> memref<!tpu.dma_semaphore, #tpu.memory_space<semaphore_mem>>
    tpu.enqueue_dma source(%50 : memref<1x32xf32, #tpu.memory_space<any>>) target(%51 : memref<1x32xf32, #tpu.memory_space<vmem>>) target_semaphore(%53 : memref<!tpu.dma_semaphore, #tpu.memory_space<semaphore_mem>>)
    %54 = arith.index_cast %arg0 : i32 to index
    %c9 = arith.constant 9 : index
    %55 = memref.load %arg1[%54, %c9] : memref<1x16xi32, #tpu.memory_space<smem>>
    %c9_i32 = arith.constant 9 : i32
    %c0_i32_27 = arith.constant 0 : i32
    %56 = tpu.memref_slice %arg2[%55, %c0_i32_27] : memref<512x32xf32, #tpu.memory_space<any>> -> memref<1x32xf32, #tpu.memory_space<any>>
    %c9_i32_28 = arith.constant 9 : i32
    %c0_i32_29 = arith.constant 0 : i32
    %57 = tpu.memref_slice %arg8[%c9_i32_28, %c0_i32_29] : memref<16x32xf32, #tpu.memory_space<vmem>> -> memref<1x32xf32, #tpu.memory_space<vmem>>
    %58 = tpu.memref_slice %arg9[%c9_i32] : memref<16x!tpu.dma_semaphore, #tpu.memory_space<semaphore_mem>> -> memref<1x!tpu.dma_semaphore, #tpu.memory_space<semaphore_mem>>
    %59 = tpu.memref_squeeze %58 : memref<1x!tpu.dma_semaphore, #tpu.memory_space<semaphore_mem>> -> memref<!tpu.dma_semaphore, #tpu.memory_space<semaphore_mem>>
    tpu.enqueue_dma source(%56 : memref<1x32xf32, #tpu.memory_space<any>>) target(%57 : memref<1x32xf32, #tpu.memory_space<vmem>>) target_semaphore(%59 : memref<!tpu.dma_semaphore, #tpu.memory_space<semaphore_mem>>)
    %60 = arith.index_cast %arg0 : i32 to index
    %c10 = arith.constant 10 : index
    %61 = memref.load %arg1[%60, %c10] : memref<1x16xi32, #tpu.memory_space<smem>>
    %c10_i32 = arith.constant 10 : i32
    %c0_i32_30 = arith.constant 0 : i32
    %62 = tpu.memref_slice %arg2[%61, %c0_i32_30] : memref<512x32xf32, #tpu.memory_space<any>> -> memref<1x32xf32, #tpu.memory_space<any>>
    %c10_i32_31 = arith.constant 10 : i32
    %c0_i32_32 = arith.constant 0 : i32
    %63 = tpu.memref_slice %arg8[%c10_i32_31, %c0_i32_32] : memref<16x32xf32, #tpu.memory_space<vmem>> -> memref<1x32xf32, #tpu.memory_space<vmem>>
    %64 = tpu.memref_slice %arg9[%c10_i32] : memref<16x!tpu.dma_semaphore, #tpu.memory_space<semaphore_mem>> -> memref<1x!tpu.dma_semaphore, #tpu.memory_space<semaphore_mem>>
    %65 = tpu.memref_squeeze %64 : memref<1x!tpu.dma_semaphore, #tpu.memory_space<semaphore_mem>> -> memref<!tpu.dma_semaphore, #tpu.memory_space<semaphore_mem>>
    tpu.enqueue_dma source(%62 : memref<1x32xf32, #tpu.memory_space<any>>) target(%63 : memref<1x32xf32, #tpu.memory_space<vmem>>) target_semaphore(%65 : memref<!tpu.dma_semaphore, #tpu.memory_space<semaphore_mem>>)
    %66 = arith.index_cast %arg0 : i32 to index
    %c11 = arith.constant 11 : index
    %67 = memref.load %arg1[%66, %c11] : memref<1x16xi32, #tpu.memory_space<smem>>
    %c11_i32 = arith.constant 11 : i32
    %c0_i32_33 = arith.constant 0 : i32
    %68 = tpu.memref_slice %arg2[%67, %c0_i32_33] : memref<512x32xf32, #tpu.memory_space<any>> -> memref<1x32xf32, #tpu.memory_space<any>>
    %c11_i32_34 = arith.constant 11 : i32
    %c0_i32_35 = arith.constant 0 : i32
    %69 = tpu.memref_slice %arg8[%c11_i32_34, %c0_i32_35] : memref<16x32xf32, #tpu.memory_space<vmem>> -> memref<1x32xf32, #tpu.memory_space<vmem>>
    %70 = tpu.memref_slice %arg9[%c11_i32] : memref<16x!tpu.dma_semaphore, #tpu.memory_space<semaphore_mem>> -> memref<1x!tpu.dma_semaphore, #tpu.memory_space<semaphore_mem>>
    %71 = tpu.memref_squeeze %70 : memref<1x!tpu.dma_semaphore, #tpu.memory_space<semaphore_mem>> -> memref<!tpu.dma_semaphore, #tpu.memory_space<semaphore_mem>>
    tpu.enqueue_dma source(%68 : memref<1x32xf32, #tpu.memory_space<any>>) target(%69 : memref<1x32xf32, #tpu.memory_space<vmem>>) target_semaphore(%71 : memref<!tpu.dma_semaphore, #tpu.memory_space<semaphore_mem>>)
    %72 = arith.index_cast %arg0 : i32 to index
    %c12 = arith.constant 12 : index
    %73 = memref.load %arg1[%72, %c12] : memref<1x16xi32, #tpu.memory_space<smem>>
    %c12_i32 = arith.constant 12 : i32
    %c0_i32_36 = arith.constant 0 : i32
    %74 = tpu.memref_slice %arg2[%73, %c0_i32_36] : memref<512x32xf32, #tpu.memory_space<any>> -> memref<1x32xf32, #tpu.memory_space<any>>
    %c12_i32_37 = arith.constant 12 : i32
    %c0_i32_38 = arith.constant 0 : i32
    %75 = tpu.memref_slice %arg8[%c12_i32_37, %c0_i32_38] : memref<16x32xf32, #tpu.memory_space<vmem>> -> memref<1x32xf32, #tpu.memory_space<vmem>>
    %76 = tpu.memref_slice %arg9[%c12_i32] : memref<16x!tpu.dma_semaphore, #tpu.memory_space<semaphore_mem>> -> memref<1x!tpu.dma_semaphore, #tpu.memory_space<semaphore_mem>>
    %77 = tpu.memref_squeeze %76 : memref<1x!tpu.dma_semaphore, #tpu.memory_space<semaphore_mem>> -> memref<!tpu.dma_semaphore, #tpu.memory_space<semaphore_mem>>
    tpu.enqueue_dma source(%74 : memref<1x32xf32, #tpu.memory_space<any>>) target(%75 : memref<1x32xf32, #tpu.memory_space<vmem>>) target_semaphore(%77 : memref<!tpu.dma_semaphore, #tpu.memory_space<semaphore_mem>>)
    %78 = arith.index_cast %arg0 : i32 to index
    %c13 = arith.constant 13 : index
    %79 = memref.load %arg1[%78, %c13] : memref<1x16xi32, #tpu.memory_space<smem>>
    %c13_i32 = arith.constant 13 : i32
    %c0_i32_39 = arith.constant 0 : i32
    %80 = tpu.memref_slice %arg2[%79, %c0_i32_39] : memref<512x32xf32, #tpu.memory_space<any>> -> memref<1x32xf32, #tpu.memory_space<any>>
    %c13_i32_40 = arith.constant 13 : i32
    %c0_i32_41 = arith.constant 0 : i32
    %81 = tpu.memref_slice %arg8[%c13_i32_40, %c0_i32_41] : memref<16x32xf32, #tpu.memory_space<vmem>> -> memref<1x32xf32, #tpu.memory_space<vmem>>
    %82 = tpu.memref_slice %arg9[%c13_i32] : memref<16x!tpu.dma_semaphore, #tpu.memory_space<semaphore_mem>> -> memref<1x!tpu.dma_semaphore, #tpu.memory_space<semaphore_mem>>
    %83 = tpu.memref_squeeze %82 : memref<1x!tpu.dma_semaphore, #tpu.memory_space<semaphore_mem>> -> memref<!tpu.dma_semaphore, #tpu.memory_space<semaphore_mem>>
    tpu.enqueue_dma source(%80 : memref<1x32xf32, #tpu.memory_space<any>>) target(%81 : memref<1x32xf32, #tpu.memory_space<vmem>>) target_semaphore(%83 : memref<!tpu.dma_semaphore, #tpu.memory_space<semaphore_mem>>)
    %84 = arith.index_cast %arg0 : i32 to index
    %c14 = arith.constant 14 : index
    %85 = memref.load %arg1[%84, %c14] : memref<1x16xi32, #tpu.memory_space<smem>>
    %c14_i32 = arith.constant 14 : i32
    %c0_i32_42 = arith.constant 0 : i32
    %86 = tpu.memref_slice %arg2[%85, %c0_i32_42] : memref<512x32xf32, #tpu.memory_space<any>> -> memref<1x32xf32, #tpu.memory_space<any>>
    %c14_i32_43 = arith.constant 14 : i32
    %c0_i32_44 = arith.constant 0 : i32
    %87 = tpu.memref_slice %arg8[%c14_i32_43, %c0_i32_44] : memref<16x32xf32, #tpu.memory_space<vmem>> -> memref<1x32xf32, #tpu.memory_space<vmem>>
    %88 = tpu.memref_slice %arg9[%c14_i32] : memref<16x!tpu.dma_semaphore, #tpu.memory_space<semaphore_mem>> -> memref<1x!tpu.dma_semaphore, #tpu.memory_space<semaphore_mem>>
    %89 = tpu.memref_squeeze %88 : memref<1x!tpu.dma_semaphore, #tpu.memory_space<semaphore_mem>> -> memref<!tpu.dma_semaphore, #tpu.memory_space<semaphore_mem>>
    tpu.enqueue_dma source(%86 : memref<1x32xf32, #tpu.memory_space<any>>) target(%87 : memref<1x32xf32, #tpu.memory_space<vmem>>) target_semaphore(%89 : memref<!tpu.dma_semaphore, #tpu.memory_space<semaphore_mem>>)
    %90 = arith.index_cast %arg0 : i32 to index
    %c15 = arith.constant 15 : index
    %91 = memref.load %arg1[%90, %c15] : memref<1x16xi32, #tpu.memory_space<smem>>
    %c15_i32 = arith.constant 15 : i32
    %c0_i32_45 = arith.constant 0 : i32
    %92 = tpu.memref_slice %arg2[%91, %c0_i32_45] : memref<512x32xf32, #tpu.memory_space<any>> -> memref<1x32xf32, #tpu.memory_space<any>>
    %c15_i32_46 = arith.constant 15 : i32
    %c0_i32_47 = arith.constant 0 : i32
    %93 = tpu.memref_slice %arg8[%c15_i32_46, %c0_i32_47] : memref<16x32xf32, #tpu.memory_space<vmem>> -> memref<1x32xf32, #tpu.memory_space<vmem>>
    %94 = tpu.memref_slice %arg9[%c15_i32] : memref<16x!tpu.dma_semaphore, #tpu.memory_space<semaphore_mem>> -> memref<1x!tpu.dma_semaphore, #tpu.memory_space<semaphore_mem>>
    %95 = tpu.memref_squeeze %94 : memref<1x!tpu.dma_semaphore, #tpu.memory_space<semaphore_mem>> -> memref<!tpu.dma_semaphore, #tpu.memory_space<semaphore_mem>>
    tpu.enqueue_dma source(%92 : memref<1x32xf32, #tpu.memory_space<any>>) target(%93 : memref<1x32xf32, #tpu.memory_space<vmem>>) target_semaphore(%95 : memref<!tpu.dma_semaphore, #tpu.memory_space<semaphore_mem>>)
    %c0_i32_48 = arith.constant 0 : i32
    %c0_i32_49 = arith.constant 0 : i32
    %96 = tpu.memref_slice %arg2[%1, %c0_i32_49] : memref<512x32xf32, #tpu.memory_space<any>> -> memref<1x32xf32, #tpu.memory_space<any>>
    %c0_i32_50 = arith.constant 0 : i32
    %c0_i32_51 = arith.constant 0 : i32
    %97 = tpu.memref_slice %arg8[%c0_i32_50, %c0_i32_51] : memref<16x32xf32, #tpu.memory_space<vmem>> -> memref<1x32xf32, #tpu.memory_space<vmem>>
    %98 = tpu.memref_slice %arg9[%c0_i32_48] : memref<16x!tpu.dma_semaphore, #tpu.memory_space<semaphore_mem>> -> memref<1x!tpu.dma_semaphore, #tpu.memory_space<semaphore_mem>>
    %99 = tpu.memref_squeeze %98 : memref<1x!tpu.dma_semaphore, #tpu.memory_space<semaphore_mem>> -> memref<!tpu.dma_semaphore, #tpu.memory_space<semaphore_mem>>
    tpu.wait_dma2 semaphore(%99 : memref<!tpu.dma_semaphore, #tpu.memory_space<semaphore_mem>>) src(%96 : memref<1x32xf32, #tpu.memory_space<any>>) dst(%97 : memref<1x32xf32, #tpu.memory_space<vmem>>)
    %c1_i32_52 = arith.constant 1 : i32
    %c0_i32_53 = arith.constant 0 : i32
    %100 = tpu.memref_slice %arg2[%7, %c0_i32_53] : memref<512x32xf32, #tpu.memory_space<any>> -> memref<1x32xf32, #tpu.memory_space<any>>
    %c1_i32_54 = arith.constant 1 : i32
    %c0_i32_55 = arith.constant 0 : i32
    %101 = tpu.memref_slice %arg8[%c1_i32_54, %c0_i32_55] : memref<16x32xf32, #tpu.memory_space<vmem>> -> memref<1x32xf32, #tpu.memory_space<vmem>>
    %102 = tpu.memref_slice %arg9[%c1_i32_52] : memref<16x!tpu.dma_semaphore, #tpu.memory_space<semaphore_mem>> -> memref<1x!tpu.dma_semaphore, #tpu.memory_space<semaphore_mem>>
    %103 = tpu.memref_squeeze %102 : memref<1x!tpu.dma_semaphore, #tpu.memory_space<semaphore_mem>> -> memref<!tpu.dma_semaphore, #tpu.memory_space<semaphore_mem>>
    tpu.wait_dma2 semaphore(%103 : memref<!tpu.dma_semaphore, #tpu.memory_space<semaphore_mem>>) src(%100 : memref<1x32xf32, #tpu.memory_space<any>>) dst(%101 : memref<1x32xf32, #tpu.memory_space<vmem>>)
    %c2_i32_56 = arith.constant 2 : i32
    %c0_i32_57 = arith.constant 0 : i32
    %104 = tpu.memref_slice %arg2[%13, %c0_i32_57] : memref<512x32xf32, #tpu.memory_space<any>> -> memref<1x32xf32, #tpu.memory_space<any>>
    %c2_i32_58 = arith.constant 2 : i32
    %c0_i32_59 = arith.constant 0 : i32
    %105 = tpu.memref_slice %arg8[%c2_i32_58, %c0_i32_59] : memref<16x32xf32, #tpu.memory_space<vmem>> -> memref<1x32xf32, #tpu.memory_space<vmem>>
    %106 = tpu.memref_slice %arg9[%c2_i32_56] : memref<16x!tpu.dma_semaphore, #tpu.memory_space<semaphore_mem>> -> memref<1x!tpu.dma_semaphore, #tpu.memory_space<semaphore_mem>>
    %107 = tpu.memref_squeeze %106 : memref<1x!tpu.dma_semaphore, #tpu.memory_space<semaphore_mem>> -> memref<!tpu.dma_semaphore, #tpu.memory_space<semaphore_mem>>
    tpu.wait_dma2 semaphore(%107 : memref<!tpu.dma_semaphore, #tpu.memory_space<semaphore_mem>>) src(%104 : memref<1x32xf32, #tpu.memory_space<any>>) dst(%105 : memref<1x32xf32, #tpu.memory_space<vmem>>)
    %c3_i32_60 = arith.constant 3 : i32
    %c0_i32_61 = arith.constant 0 : i32
    %108 = tpu.memref_slice %arg2[%19, %c0_i32_61] : memref<512x32xf32, #tpu.memory_space<any>> -> memref<1x32xf32, #tpu.memory_space<any>>
    %c3_i32_62 = arith.constant 3 : i32
    %c0_i32_63 = arith.constant 0 : i32
    %109 = tpu.memref_slice %arg8[%c3_i32_62, %c0_i32_63] : memref<16x32xf32, #tpu.memory_space<vmem>> -> memref<1x32xf32, #tpu.memory_space<vmem>>
    %110 = tpu.memref_slice %arg9[%c3_i32_60] : memref<16x!tpu.dma_semaphore, #tpu.memory_space<semaphore_mem>> -> memref<1x!tpu.dma_semaphore, #tpu.memory_space<semaphore_mem>>
    %111 = tpu.memref_squeeze %110 : memref<1x!tpu.dma_semaphore, #tpu.memory_space<semaphore_mem>> -> memref<!tpu.dma_semaphore, #tpu.memory_space<semaphore_mem>>
    tpu.wait_dma2 semaphore(%111 : memref<!tpu.dma_semaphore, #tpu.memory_space<semaphore_mem>>) src(%108 : memref<1x32xf32, #tpu.memory_space<any>>) dst(%109 : memref<1x32xf32, #tpu.memory_space<vmem>>)
    %c4_i32_64 = arith.constant 4 : i32
    %c0_i32_65 = arith.constant 0 : i32
    %112 = tpu.memref_slice %arg2[%25, %c0_i32_65] : memref<512x32xf32, #tpu.memory_space<any>> -> memref<1x32xf32, #tpu.memory_space<any>>
    %c4_i32_66 = arith.constant 4 : i32
    %c0_i32_67 = arith.constant 0 : i32
    %113 = tpu.memref_slice %arg8[%c4_i32_66, %c0_i32_67] : memref<16x32xf32, #tpu.memory_space<vmem>> -> memref<1x32xf32, #tpu.memory_space<vmem>>
    %114 = tpu.memref_slice %arg9[%c4_i32_64] : memref<16x!tpu.dma_semaphore, #tpu.memory_space<semaphore_mem>> -> memref<1x!tpu.dma_semaphore, #tpu.memory_space<semaphore_mem>>
    %115 = tpu.memref_squeeze %114 : memref<1x!tpu.dma_semaphore, #tpu.memory_space<semaphore_mem>> -> memref<!tpu.dma_semaphore, #tpu.memory_space<semaphore_mem>>
    tpu.wait_dma2 semaphore(%115 : memref<!tpu.dma_semaphore, #tpu.memory_space<semaphore_mem>>) src(%112 : memref<1x32xf32, #tpu.memory_space<any>>) dst(%113 : memref<1x32xf32, #tpu.memory_space<vmem>>)
    %c5_i32_68 = arith.constant 5 : i32
    %c0_i32_69 = arith.constant 0 : i32
    %116 = tpu.memref_slice %arg2[%31, %c0_i32_69] : memref<512x32xf32, #tpu.memory_space<any>> -> memref<1x32xf32, #tpu.memory_space<any>>
    %c5_i32_70 = arith.constant 5 : i32
    %c0_i32_71 = arith.constant 0 : i32
    %117 = tpu.memref_slice %arg8[%c5_i32_70, %c0_i32_71] : memref<16x32xf32, #tpu.memory_space<vmem>> -> memref<1x32xf32, #tpu.memory_space<vmem>>
    %118 = tpu.memref_slice %arg9[%c5_i32_68] : memref<16x!tpu.dma_semaphore, #tpu.memory_space<semaphore_mem>> -> memref<1x!tpu.dma_semaphore, #tpu.memory_space<semaphore_mem>>
    %119 = tpu.memref_squeeze %118 : memref<1x!tpu.dma_semaphore, #tpu.memory_space<semaphore_mem>> -> memref<!tpu.dma_semaphore, #tpu.memory_space<semaphore_mem>>
    tpu.wait_dma2 semaphore(%119 : memref<!tpu.dma_semaphore, #tpu.memory_space<semaphore_mem>>) src(%116 : memref<1x32xf32, #tpu.memory_space<any>>) dst(%117 : memref<1x32xf32, #tpu.memory_space<vmem>>)
    %c6_i32_72 = arith.constant 6 : i32
    %c0_i32_73 = arith.constant 0 : i32
    %120 = tpu.memref_slice %arg2[%37, %c0_i32_73] : memref<512x32xf32, #tpu.memory_space<any>> -> memref<1x32xf32, #tpu.memory_space<any>>
    %c6_i32_74 = arith.constant 6 : i32
    %c0_i32_75 = arith.constant 0 : i32
    %121 = tpu.memref_slice %arg8[%c6_i32_74, %c0_i32_75] : memref<16x32xf32, #tpu.memory_space<vmem>> -> memref<1x32xf32, #tpu.memory_space<vmem>>
    %122 = tpu.memref_slice %arg9[%c6_i32_72] : memref<16x!tpu.dma_semaphore, #tpu.memory_space<semaphore_mem>> -> memref<1x!tpu.dma_semaphore, #tpu.memory_space<semaphore_mem>>
    %123 = tpu.memref_squeeze %122 : memref<1x!tpu.dma_semaphore, #tpu.memory_space<semaphore_mem>> -> memref<!tpu.dma_semaphore, #tpu.memory_space<semaphore_mem>>
    tpu.wait_dma2 semaphore(%123 : memref<!tpu.dma_semaphore, #tpu.memory_space<semaphore_mem>>) src(%120 : memref<1x32xf32, #tpu.memory_space<any>>) dst(%121 : memref<1x32xf32, #tpu.memory_space<vmem>>)
    %c7_i32_76 = arith.constant 7 : i32
    %c0_i32_77 = arith.constant 0 : i32
    %124 = tpu.memref_slice %arg2[%43, %c0_i32_77] : memref<512x32xf32, #tpu.memory_space<any>> -> memref<1x32xf32, #tpu.memory_space<any>>
    %c7_i32_78 = arith.constant 7 : i32
    %c0_i32_79 = arith.constant 0 : i32
    %125 = tpu.memref_slice %arg8[%c7_i32_78, %c0_i32_79] : memref<16x32xf32, #tpu.memory_space<vmem>> -> memref<1x32xf32, #tpu.memory_space<vmem>>
    %126 = tpu.memref_slice %arg9[%c7_i32_76] : memref<16x!tpu.dma_semaphore, #tpu.memory_space<semaphore_mem>> -> memref<1x!tpu.dma_semaphore, #tpu.memory_space<semaphore_mem>>
    %127 = tpu.memref_squeeze %126 : memref<1x!tpu.dma_semaphore, #tpu.memory_space<semaphore_mem>> -> memref<!tpu.dma_semaphore, #tpu.memory_space<semaphore_mem>>
    tpu.wait_dma2 semaphore(%127 : memref<!tpu.dma_semaphore, #tpu.memory_space<semaphore_mem>>) src(%124 : memref<1x32xf32, #tpu.memory_space<any>>) dst(%125 : memref<1x32xf32, #tpu.memory_space<vmem>>)
    %c8_i32_80 = arith.constant 8 : i32
    %c0_i32_81 = arith.constant 0 : i32
    %128 = tpu.memref_slice %arg2[%49, %c0_i32_81] : memref<512x32xf32, #tpu.memory_space<any>> -> memref<1x32xf32, #tpu.memory_space<any>>
    %c8_i32_82 = arith.constant 8 : i32
    %c0_i32_83 = arith.constant 0 : i32
    %129 = tpu.memref_slice %arg8[%c8_i32_82, %c0_i32_83] : memref<16x32xf32, #tpu.memory_space<vmem>> -> memref<1x32xf32, #tpu.memory_space<vmem>>
    %130 = tpu.memref_slice %arg9[%c8_i32_80] : memref<16x!tpu.dma_semaphore, #tpu.memory_space<semaphore_mem>> -> memref<1x!tpu.dma_semaphore, #tpu.memory_space<semaphore_mem>>
    %131 = tpu.memref_squeeze %130 : memref<1x!tpu.dma_semaphore, #tpu.memory_space<semaphore_mem>> -> memref<!tpu.dma_semaphore, #tpu.memory_space<semaphore_mem>>
    tpu.wait_dma2 semaphore(%131 : memref<!tpu.dma_semaphore, #tpu.memory_space<semaphore_mem>>) src(%128 : memref<1x32xf32, #tpu.memory_space<any>>) dst(%129 : memref<1x32xf32, #tpu.memory_space<vmem>>)
    %c9_i32_84 = arith.constant 9 : i32
    %c0_i32_85 = arith.constant 0 : i32
    %132 = tpu.memref_slice %arg2[%55, %c0_i32_85] : memref<512x32xf32, #tpu.memory_space<any>> -> memref<1x32xf32, #tpu.memory_space<any>>
    %c9_i32_86 = arith.constant 9 : i32
    %c0_i32_87 = arith.constant 0 : i32
    %133 = tpu.memref_slice %arg8[%c9_i32_86, %c0_i32_87] : memref<16x32xf32, #tpu.memory_space<vmem>> -> memref<1x32xf32, #tpu.memory_space<vmem>>
    %134 = tpu.memref_slice %arg9[%c9_i32_84] : memref<16x!tpu.dma_semaphore, #tpu.memory_space<semaphore_mem>> -> memref<1x!tpu.dma_semaphore, #tpu.memory_space<semaphore_mem>>
    %135 = tpu.memref_squeeze %134 : memref<1x!tpu.dma_semaphore, #tpu.memory_space<semaphore_mem>> -> memref<!tpu.dma_semaphore, #tpu.memory_space<semaphore_mem>>
    tpu.wait_dma2 semaphore(%135 : memref<!tpu.dma_semaphore, #tpu.memory_space<semaphore_mem>>) src(%132 : memref<1x32xf32, #tpu.memory_space<any>>) dst(%133 : memref<1x32xf32, #tpu.memory_space<vmem>>)
    %c10_i32_88 = arith.constant 10 : i32
    %c0_i32_89 = arith.constant 0 : i32
    %136 = tpu.memref_slice %arg2[%61, %c0_i32_89] : memref<512x32xf32, #tpu.memory_space<any>> -> memref<1x32xf32, #tpu.memory_space<any>>
    %c10_i32_90 = arith.constant 10 : i32
    %c0_i32_91 = arith.constant 0 : i32
    %137 = tpu.memref_slice %arg8[%c10_i32_90, %c0_i32_91] : memref<16x32xf32, #tpu.memory_space<vmem>> -> memref<1x32xf32, #tpu.memory_space<vmem>>
    %138 = tpu.memref_slice %arg9[%c10_i32_88] : memref<16x!tpu.dma_semaphore, #tpu.memory_space<semaphore_mem>> -> memref<1x!tpu.dma_semaphore, #tpu.memory_space<semaphore_mem>>
    %139 = tpu.memref_squeeze %138 : memref<1x!tpu.dma_semaphore, #tpu.memory_space<semaphore_mem>> -> memref<!tpu.dma_semaphore, #tpu.memory_space<semaphore_mem>>
    tpu.wait_dma2 semaphore(%139 : memref<!tpu.dma_semaphore, #tpu.memory_space<semaphore_mem>>) src(%136 : memref<1x32xf32, #tpu.memory_space<any>>) dst(%137 : memref<1x32xf32, #tpu.memory_space<vmem>>)
    %c11_i32_92 = arith.constant 11 : i32
    %c0_i32_93 = arith.constant 0 : i32
    %140 = tpu.memref_slice %arg2[%67, %c0_i32_93] : memref<512x32xf32, #tpu.memory_space<any>> -> memref<1x32xf32, #tpu.memory_space<any>>
    %c11_i32_94 = arith.constant 11 : i32
    %c0_i32_95 = arith.constant 0 : i32
    %141 = tpu.memref_slice %arg8[%c11_i32_94, %c0_i32_95] : memref<16x32xf32, #tpu.memory_space<vmem>> -> memref<1x32xf32, #tpu.memory_space<vmem>>
    %142 = tpu.memref_slice %arg9[%c11_i32_92] : memref<16x!tpu.dma_semaphore, #tpu.memory_space<semaphore_mem>> -> memref<1x!tpu.dma_semaphore, #tpu.memory_space<semaphore_mem>>
    %143 = tpu.memref_squeeze %142 : memref<1x!tpu.dma_semaphore, #tpu.memory_space<semaphore_mem>> -> memref<!tpu.dma_semaphore, #tpu.memory_space<semaphore_mem>>
    tpu.wait_dma2 semaphore(%143 : memref<!tpu.dma_semaphore, #tpu.memory_space<semaphore_mem>>) src(%140 : memref<1x32xf32, #tpu.memory_space<any>>) dst(%141 : memref<1x32xf32, #tpu.memory_space<vmem>>)
    %c12_i32_96 = arith.constant 12 : i32
    %c0_i32_97 = arith.constant 0 : i32
    %144 = tpu.memref_slice %arg2[%73, %c0_i32_97] : memref<512x32xf32, #tpu.memory_space<any>> -> memref<1x32xf32, #tpu.memory_space<any>>
    %c12_i32_98 = arith.constant 12 : i32
    %c0_i32_99 = arith.constant 0 : i32
    %145 = tpu.memref_slice %arg8[%c12_i32_98, %c0_i32_99] : memref<16x32xf32, #tpu.memory_space<vmem>> -> memref<1x32xf32, #tpu.memory_space<vmem>>
    %146 = tpu.memref_slice %arg9[%c12_i32_96] : memref<16x!tpu.dma_semaphore, #tpu.memory_space<semaphore_mem>> -> memref<1x!tpu.dma_semaphore, #tpu.memory_space<semaphore_mem>>
    %147 = tpu.memref_squeeze %146 : memref<1x!tpu.dma_semaphore, #tpu.memory_space<semaphore_mem>> -> memref<!tpu.dma_semaphore, #tpu.memory_space<semaphore_mem>>
    tpu.wait_dma2 semaphore(%147 : memref<!tpu.dma_semaphore, #tpu.memory_space<semaphore_mem>>) src(%144 : memref<1x32xf32, #tpu.memory_space<any>>) dst(%145 : memref<1x32xf32, #tpu.memory_space<vmem>>)
    %c13_i32_100 = arith.constant 13 : i32
    %c0_i32_101 = arith.constant 0 : i32
    %148 = tpu.memref_slice %arg2[%79, %c0_i32_101] : memref<512x32xf32, #tpu.memory_space<any>> -> memref<1x32xf32, #tpu.memory_space<any>>
    %c13_i32_102 = arith.constant 13 : i32
    %c0_i32_103 = arith.constant 0 : i32
    %149 = tpu.memref_slice %arg8[%c13_i32_102, %c0_i32_103] : memref<16x32xf32, #tpu.memory_space<vmem>> -> memref<1x32xf32, #tpu.memory_space<vmem>>
    %150 = tpu.memref_slice %arg9[%c13_i32_100] : memref<16x!tpu.dma_semaphore, #tpu.memory_space<semaphore_mem>> -> memref<1x!tpu.dma_semaphore, #tpu.memory_space<semaphore_mem>>
    %151 = tpu.memref_squeeze %150 : memref<1x!tpu.dma_semaphore, #tpu.memory_space<semaphore_mem>> -> memref<!tpu.dma_semaphore, #tpu.memory_space<semaphore_mem>>
    tpu.wait_dma2 semaphore(%151 : memref<!tpu.dma_semaphore, #tpu.memory_space<semaphore_mem>>) src(%148 : memref<1x32xf32, #tpu.memory_space<any>>) dst(%149 : memref<1x32xf32, #tpu.memory_space<vmem>>)
    %c14_i32_104 = arith.constant 14 : i32
    %c0_i32_105 = arith.constant 0 : i32
    %152 = tpu.memref_slice %arg2[%85, %c0_i32_105] : memref<512x32xf32, #tpu.memory_space<any>> -> memref<1x32xf32, #tpu.memory_space<any>>
    %c14_i32_106 = arith.constant 14 : i32
    %c0_i32_107 = arith.constant 0 : i32
    %153 = tpu.memref_slice %arg8[%c14_i32_106, %c0_i32_107] : memref<16x32xf32, #tpu.memory_space<vmem>> -> memref<1x32xf32, #tpu.memory_space<vmem>>
    %154 = tpu.memref_slice %arg9[%c14_i32_104] : memref<16x!tpu.dma_semaphore, #tpu.memory_space<semaphore_mem>> -> memref<1x!tpu.dma_semaphore, #tpu.memory_space<semaphore_mem>>
    %155 = tpu.memref_squeeze %154 : memref<1x!tpu.dma_semaphore, #tpu.memory_space<semaphore_mem>> -> memref<!tpu.dma_semaphore, #tpu.memory_space<semaphore_mem>>
    tpu.wait_dma2 semaphore(%155 : memref<!tpu.dma_semaphore, #tpu.memory_space<semaphore_mem>>) src(%152 : memref<1x32xf32, #tpu.memory_space<any>>) dst(%153 : memref<1x32xf32, #tpu.memory_space<vmem>>)
    %c15_i32_108 = arith.constant 15 : i32
    %c0_i32_109 = arith.constant 0 : i32
    %156 = tpu.memref_slice %arg2[%91, %c0_i32_109] : memref<512x32xf32, #tpu.memory_space<any>> -> memref<1x32xf32, #tpu.memory_space<any>>
    %c15_i32_110 = arith.constant 15 : i32
    %c0_i32_111 = arith.constant 0 : i32
    %157 = tpu.memref_slice %arg8[%c15_i32_110, %c0_i32_111] : memref<16x32xf32, #tpu.memory_space<vmem>> -> memref<1x32xf32, #tpu.memory_space<vmem>>
    %158 = tpu.memref_slice %arg9[%c15_i32_108] : memref<16x!tpu.dma_semaphore, #tpu.memory_space<semaphore_mem>> -> memref<1x!tpu.dma_semaphore, #tpu.memory_space<semaphore_mem>>
    %159 = tpu.memref_squeeze %158 : memref<1x!tpu.dma_semaphore, #tpu.memory_space<semaphore_mem>> -> memref<!tpu.dma_semaphore, #tpu.memory_space<semaphore_mem>>
    tpu.wait_dma2 semaphore(%159 : memref<!tpu.dma_semaphore, #tpu.memory_space<semaphore_mem>>) src(%156 : memref<1x32xf32, #tpu.memory_space<any>>) dst(%157 : memref<1x32xf32, #tpu.memory_space<vmem>>)
    %c0_112 = arith.constant 0 : index
    %c0_113 = arith.constant 0 : index
    %160 = vector.load %arg8[%c0_112, %c0_113] : memref<16x32xf32, #tpu.memory_space<vmem>>, vector<16x32xf32>
    %c0_114 = arith.constant 0 : index
    %c0_115 = arith.constant 0 : index
    %c0_116 = arith.constant 0 : index
    %161 = vector.load %arg3[%c0_114, %c0_115, %c0_116] : memref<1x16x1xf32, #tpu.memory_space<vmem>>, vector<1x16x1xf32>
    %162 = vector.shape_cast %161 : vector<1x16x1xf32> to vector<16x1xf32>
    %c0_117 = arith.constant 0 : index
    %c0_118 = arith.constant 0 : index
    %c0_119 = arith.constant 0 : index
    %163 = vector.load %arg4[%c0_117, %c0_118, %c0_119] : memref<1x16x1xi32, #tpu.memory_space<vmem>>, vector<1x16x1xi32>
    %164 = vector.shape_cast %163 : vector<1x16x1xi32> to vector<16x1xi32>
    %165 = arith.mulf %160, %160 : vector<16x32xf32>
    %cst = arith.constant dense<0.000000e+00> : vector<16xf32>
    %166 = vector.multi_reduction <add>, %165, %cst [1] : vector<16x32xf32> to vector<16xf32>
    %167 = vector.shape_cast %166 : vector<16xf32> to vector<16x1xf32>
    %cst_120 = arith.constant 1.000000e-24 : f32
    %168 = vector.broadcast %cst_120 : f32 to vector<16x1xf32>
    %169 = arith.maximumf %167, %168 : vector<16x1xf32>
    %170 = math.rsqrt %169 : vector<16x1xf32>
    %cst_121 = arith.constant 5.18105841 : f32
    %171 = vector.broadcast %cst_121 : f32 to vector<16x1xf32>
    %172 = arith.mulf %171, %170 : vector<16x1xf32>
    %173 = vector.broadcast %172 : vector<16x1xf32> to vector<16x32xf32>
    %174 = arith.mulf %160, %173 : vector<16x32xf32>
    %cst_122 = arith.constant 0xFF800000 : f32
    %175 = vector.broadcast %cst_122 : f32 to vector<16x1xf32>
    %cst_123 = arith.constant 0.000000e+00 : f32
    %176 = vector.broadcast %cst_123 : f32 to vector<16x1xf32>
    %cst_124 = arith.constant 0.000000e+00 : f32
    %177 = vector.broadcast %cst_124 : f32 to vector<16x1xf32>
    %c0_125 = arith.constant 0 : index
    %c0_126 = arith.constant 0 : index
    %178 = vector.load %arg5[%c0_125, %c0_126] : memref<32x40xf32, #tpu.memory_space<vmem>>, vector<32x40xf32>
    %cst_127 = arith.constant dense<0.000000e+00> : vector<16x40xf32>
    %179 = tpu.matmul %174, %178, %cst_127 {dimension_numbers = #tpu.dot_dimension_numbers<[1], [0], [0], [1], [0, 0, 1, 1], [], []>} : vector<16x32xf32>, vector<32x40xf32>, vector<16x40xf32> -> vector<16x40xf32>
    %c0_128 = arith.constant 0 : index
    %c0_129 = arith.constant 0 : index
    %180 = vector.load %arg6[%c0_128, %c0_129] : memref<1x40xf32, #tpu.memory_space<vmem>>, vector<1x40xf32>
    %181 = vector.broadcast %180 : vector<1x40xf32> to vector<16x40xf32>
    %182 = arith.addf %179, %181 : vector<16x40xf32>
    %cst_130 = arith.constant dense<0xFF800000> : vector<16xf32>
    %183 = vector.multi_reduction <maximumf>, %182, %cst_130 [1] : vector<16x40xf32> to vector<16xf32>
    %184 = vector.shape_cast %183 : vector<16xf32> to vector<16x1xf32>
    %185 = arith.maximumf %175, %184 : vector<16x1xf32>
    %186 = arith.subf %175, %185 : vector<16x1xf32>
    %187 = math.exp %186 : vector<16x1xf32>
    %188 = arith.mulf %187, %176 : vector<16x1xf32>
    %189 = vector.broadcast %185 : vector<16x1xf32> to vector<16x40xf32>
    %190 = arith.subf %182, %189 : vector<16x40xf32>
    %191 = math.exp %190 : vector<16x40xf32>
    %cst_131 = arith.constant dense<0.000000e+00> : vector<16xf32>
    %192 = vector.multi_reduction <add>, %191, %cst_131 [1] : vector<16x40xf32> to vector<16xf32>
    %193 = vector.shape_cast %192 : vector<16xf32> to vector<16x1xf32>
    %194 = arith.addf %188, %193 : vector<16x1xf32>
    %195 = tpu.iota {dimensions = array<i32: 1>} : vector<16x40xi32>
    %c0_i32_132 = arith.constant 0 : i32
    %196 = vector.broadcast %c0_i32_132 : i32 to vector<16x40xi32>
    %197 = arith.addi %195, %196 : vector<16x40xi32>
    %198 = vector.broadcast %164 : vector<16x1xi32> to vector<16x40xi32>
    %199 = arith.cmpi eq, %197, %198 : vector<16x40xi32>
    %cst_133 = arith.constant 0.000000e+00 : f32
    %200 = vector.broadcast %cst_133 : f32 to vector<16x40xf32>
    %201 = arith.select %199, %182, %200 : vector<16x40xi1>, vector<16x40xf32>
    %cst_134 = arith.constant dense<0.000000e+00> : vector<16xf32>
    %202 = vector.multi_reduction <add>, %201, %cst_134 [1] : vector<16x40xf32> to vector<16xf32>
    %203 = vector.shape_cast %202 : vector<16xf32> to vector<16x1xf32>
    %204 = arith.addf %177, %203 : vector<16x1xf32>
    %205 = math.log %194 : vector<16x1xf32>
    %206 = arith.addf %185, %205 : vector<16x1xf32>
    %207 = arith.subf %206, %204 : vector<16x1xf32>
    %cst_135 = arith.constant 0.000000e+00 : f32
    %208 = vector.broadcast %cst_135 : f32 to vector<16x1xf32>
    %209 = arith.cmpf ogt, %162, %208 : vector<16x1xf32>
    %c0_i32_136 = arith.constant 0 : i32
    %210 = vector.broadcast %c0_i32_136 : i32 to vector<16x1xi32>
    %211 = arith.cmpi sge, %164, %210 : vector<16x1xi32>
    %212 = arith.andi %209, %211 : vector<16x1xi1>
    %213 = arith.extui %212 : vector<16x1xi1> to vector<16x1xi32>
    %214 = arith.sitofp %213 : vector<16x1xi32> to vector<16x1xf32>
    %215 = arith.mulf %207, %214 : vector<16x1xf32>
    %c0_137 = arith.constant 0 : index
    %c0_138 = arith.constant 0 : index
    %c0_139 = arith.constant 0 : index
    %216 = vector.load %arg7[%c0_137, %c0_138, %c0_139] : memref<1x16x2xf32, #tpu.memory_space<vmem>>, vector<1x16x1xf32>
    %217 = vector.shape_cast %216 : vector<1x16x1xf32> to vector<16x1xf32>
    %218 = vector.shape_cast %215 : vector<16x1xf32> to vector<1x16x1xf32>
    tpu.vector_store %arg7[%c0_137, %c0_138, %c0_139], %218 {strides = array<i32>} : memref<1x16x2xf32, #tpu.memory_space<vmem>>, vector<1x16x1xf32>,
    %c0_140 = arith.constant 0 : index
    %c0_141 = arith.constant 0 : index
    %c1_142 = arith.constant 1 : index
    %219 = vector.load %arg7[%c0_140, %c0_141, %c1_142] : memref<1x16x2xf32, #tpu.memory_space<vmem>>, vector<1x16x1xf32>
    %220 = vector.shape_cast %219 : vector<1x16x1xf32> to vector<16x1xf32>
    %221 = vector.shape_cast %214 : vector<16x1xf32> to vector<1x16x1xf32>
    tpu.vector_store %arg7[%c0_140, %c0_141, %c1_142], %221 {strides = array<i32>} : memref<1x16x2xf32, #tpu.memory_space<vmem>>, vector<1x16x1xf32>,
    return
  }
  func.func @transform_1(%arg0: i32, %arg1: memref<1x16xi32, #tpu.memory_space<smem>>) -> (i32, i32, i32) {
    %c0_i32 = arith.constant 0 : i32
    %c0_i32_0 = arith.constant 0 : i32
    %c0_i32_1 = arith.constant 0 : i32
    return %arg0, %c0_i32, %c0_i32_0 : i32, i32, i32
  }
  func.func @transform_2(%arg0: i32, %arg1: memref<1x16xi32, #tpu.memory_space<smem>>) -> (i32, i32, i32) {
    %c0_i32 = arith.constant 0 : i32
    %c0_i32_0 = arith.constant 0 : i32
    %c0_i32_1 = arith.constant 0 : i32
    return %arg0, %c0_i32, %c0_i32_0 : i32, i32, i32
  }
  func.func @transform_3(%arg0: i32, %arg1: memref<1x16xi32, #tpu.memory_space<smem>>) -> (i32, i32) {
    %c0_i32 = arith.constant 0 : i32
    %c0_i32_0 = arith.constant 0 : i32
    %c0_i32_1 = arith.constant 0 : i32
    return %c0_i32, %c0_i32_0 : i32, i32
  }
  func.func @transform_4(%arg0: i32, %arg1: memref<1x16xi32, #tpu.memory_space<smem>>) -> (i32, i32) {
    %c0_i32 = arith.constant 0 : i32
    %c0_i32_0 = arith.constant 0 : i32
    %c0_i32_1 = arith.constant 0 : i32
    return %c0_i32, %c0_i32_0 : i32, i32
  }
  func.func @transform_5(%arg0: i32, %arg1: memref<1x16xi32, #tpu.memory_space<smem>>) -> (i32, i32, i32) {
    %c0_i32 = arith.constant 0 : i32
    %c0_i32_0 = arith.constant 0 : i32
    %c0_i32_1 = arith.constant 0 : i32
    return %arg0, %c0_i32, %c0_i32_0 : i32, i32, i32
  }
}

</mosaic_0001>

<llo_original>
// kernel: tpu_custom_call.1
$region0: #{tpu_custom_call.1}
  #allocation0 [shape = 'u32[]', space=smem, size = 0x4, offset = 0x4, fixed_abs, tag = 'smem constant byte address 0x4 - core index']
  #allocation1 [shape = 'u32[144,128]{1,0:T(1,128)}', space=vmem, size = 0x12000, scoped, tag = 'internal scratch']
  #allocation2 [shape = 'f32[16,32]{1,0:T(8,128)}', space=vmem, size = 0x2000, scoped, tag = 'scratch operand']
  #allocation3 [shape = 's32[16]{0}', space=sflag, size = 0x40, scoped, tag = 'scratch operand']
  #allocation4 [shape = 's32[1]{0}', space=sflag, size = 0x4, scoped, tag = 'scoped memory for tpu_custom_call.1']
  #allocation5 [shape = 'u8[512]{0}', space=smem, size = 0x200, scoped, tag = 'prefetched SMEM operand 0']
  #allocation6 [shape = 's32[]', space=sflag, size = 0x4, offset = 0, fixed_abs, tag = 'sflag constant byte address 0x0 - dummy sync flag']
  #allocation7 [shape = 's32[]', space=sflag, size = 0x4, offset = 0, fixed_abs, tag = 'sflag constant byte address 0x0 - dummy sync flag']
  #allocation8 [shape = 's32[]', space=sflag, size = 0x4, offset = 0, fixed_abs, tag = 'sflag constant byte address 0x0 - dummy sync flag']
  #allocation9 [shape = 's32[]', space=sflag, size = 0x4, offset = 0, fixed_abs, tag = 'sflag constant byte address 0x0 - dummy sync flag']
  #allocation10 [shape = 's32[]', space=sflag, size = 0x4, offset = 0, fixed_abs, tag = 'sflag constant byte address 0x0 - dummy sync flag']
  #allocation11 [shape = 's32[]', space=sflag, size = 0x4, offset = 0, fixed_abs, tag = 'sflag constant byte address 0x0 - dummy sync flag']
  #allocation12 [shape = 's32[]', space=sflag, size = 0x4, offset = 0, fixed_abs, tag = 'sflag constant byte address 0x0 - dummy sync flag']
  #allocation13 [shape = 's32[]', space=sflag, size = 0x4, offset = 0, fixed_abs, tag = 'sflag constant byte address 0x0 - dummy sync flag']
  #allocation14 [shape = 's32[]', space=sflag, size = 0x4, offset = 0, fixed_abs, tag = 'sflag constant byte address 0x0 - dummy sync flag']
  #allocation15 [shape = 's32[]', space=sflag, size = 0x4, offset = 0, fixed_abs, tag = 'sflag constant byte address 0x0 - dummy sync flag']
  #allocation16 [shape = 's32[]', space=sflag, size = 0x4, offset = 0, fixed_abs, tag = 'sflag constant byte address 0x0 - dummy sync flag']
  #allocation17 [shape = 's32[]', space=sflag, size = 0x4, offset = 0, fixed_abs, tag = 'sflag constant byte address 0x0 - dummy sync flag']
  #allocation18 [shape = 's32[]', space=sflag, size = 0x4, offset = 0, fixed_abs, tag = 'sflag constant byte address 0x0 - dummy sync flag']
  #allocation19 [shape = 's32[]', space=sflag, size = 0x4, offset = 0, fixed_abs, tag = 'sflag constant byte address 0x0 - dummy sync flag']
  #allocation20 [shape = 's32[]', space=sflag, size = 0x4, offset = 0, fixed_abs, tag = 'sflag constant byte address 0x0 - dummy sync flag']
  #allocation21 [shape = 's32[]', space=sflag, size = 0x4, offset = 0, fixed_abs, tag = 'sflag constant byte address 0x0 - dummy sync flag']
  %s0 = inlined_call_operand.vmem [shape: s32[1,16], index: 0, kind: input, shape index: {}]
  %s1 = inlined_call_operand.vmem [shape: f32[512,32], index: 1, kind: input, shape index: {}]
  %s2 = inlined_call_operand.vmem [shape: f32[1,16,1], index: 2, kind: input, shape index: {}]
  %s3 = inlined_call_operand.vmem [shape: s32[1,16,1], index: 3, kind: input, shape index: {}]
  %s4 = inlined_call_operand.vmem [shape: f32[32,40], index: 4, kind: input, shape index: {}]
  %s5 = inlined_call_operand.vmem [shape: f32[1,40], index: 5, kind: input, shape index: {}]
  %s6 = inlined_call_operand.vmem [shape: f32[1,16,2], index: 6, kind: output, shape index: {}]
  %s7 = sld [smem:[#allocation0]]
  $region506: #{tpu_custom_call.1} parent=0
    _
  %s9 = ssub.s32 1, %s7
  %s10 = scalar_select 0, %s9, %s7
  %s11 = sshll.u32 %s0, 4
  %s12 = int_to_ptr.vmem [resolvable:$true] %s11
  %14 = dma.vmem_to_smem %s12, 16, [#allocation5], [#allocation4]
  %15 = dma.done [#allocation4], 16
  %16 = sfence
  // Predicated region
  $region2: #{tpu_custom_call.1} parent=0 // pred_check
    _
  $region3: #{tpu_custom_call.1} parent=0 // pred_check_branch
    %18 = sbr.rel (0) target = $region5
  $region4: #{tpu_custom_call.1} parent=0 // pred_region
    _
  $region5: #{tpu_custom_call.1} parent=0 // pred_fallthru
    _
  // Predicated region
  $region6: #{tpu_custom_call.1} parent=0 // pred_check
    _
  $region7: #{tpu_custom_call.1} parent=0 // pred_check_branch
    %20 = sbr.rel (0) target = $region9
  $region8: #{tpu_custom_call.1} parent=0 // pred_region
    _
  $region9: #{tpu_custom_call.1} parent=0 // pred_fallthru
    _
  // Predicated region
  $region10: #{tpu_custom_call.1} parent=0 // pred_check
    _
  $region11: #{tpu_custom_call.1} parent=0 // pred_check_branch
    %22 = sbr.rel (0) target = $region13
  $region12: #{tpu_custom_call.1} parent=0 // pred_region
    _
  $region13: #{tpu_custom_call.1} parent=0 // pred_fallthru
    _
  // Predicated region
  $region14: #{tpu_custom_call.1} parent=0 // pred_check
    _
  $region15: #{tpu_custom_call.1} parent=0 // pred_check_branch
    %24 = sbr.rel (0) target = $region17
  $region16: #{tpu_custom_call.1} parent=0 // pred_region
    _
  $region17: #{tpu_custom_call.1} parent=0 // pred_fallthru
    _
  %s25 = smul.u32 0, 128
  %s26 = sld [smem:[#allocation5 + %s25]]
  %s27 = scalar_lea.vmem %s1, %s26
  %p29 = scmp.lt.u32.totalorder 1, 8
  %p30 = pneg %p29
  // Predicated region
  $region18: #{tpu_custom_call.1} parent=0 // pred_check
    _
  $region19: #{tpu_custom_call.1} parent=0 // pred_check_branch
    %32 = sbr.rel (%p29) target = $region21
  $region20: #{tpu_custom_call.1} parent=0 // pred_region
    %s47 = sand.u32 1, 7
    %p48 = scmp.eq.s32.totalorder %s47, 0
    %p49 = pneg %p48
    // Predicated region
    $region33: #{tpu_custom_call.1} parent=20 // pred_check
      _
    $region34: #{tpu_custom_call.1} parent=20 // pred_check_branch
      %51 = sbr.rel (%p48) target = $region36
    $region35: #{tpu_custom_call.1} parent=20 // pred_region
      %s52 = sand.u32 1, 7
      %s53 = ssub.s32 1, %s52
      %s54 = scalar_lea.vmem %s27, %s53
      %s55 = ssub.s32 1, %s52
      %s56 = scalar_lea.vmem [#allocation2], %s55
      %s57 = sshllo.u32 0, %s52
      loop: start=0, step=1, limit=1
      $region37: #{tpu_custom_call.1} parent=35 // loop_pre_header
        _
      $region38: #{tpu_custom_call.1} parent=35 // loop_header
        %s59 = sphi 0, %s63
        %p60 = scmp.ge.s32.totalorder %s59, 1
        %s64 = sphi %s54, %s54
        %s65 = sphi %s56, %s56
      $region39: #{tpu_custom_call.1} parent=35 // loop_header_branch
        %62 = sbr.rel (%p60) target = $region43
      $region40: #{tpu_custom_call.1} parent=35 // loop_body
        %v66 = vld [vmem:[%s64] sm:%s57]
        %67 = vst [vmem:[%s65] sm:%s57] %v66
      $region41: #{tpu_custom_call.1} parent=35 // loop_footer
        %s63 = sadd.s32 1, %s59
      $region42: #{tpu_custom_call.1} parent=35 // loop_footer_branch
        %58 = sbr.rel target = $region38
      $region43: #{tpu_custom_call.1} parent=35 // loop_exit
        _
    $region36: #{tpu_custom_call.1} parent=20 // pred_fallthru
      _
  $region21: #{tpu_custom_call.1} parent=0 // pred_fallthru
    _
  // Predicated region
  $region22: #{tpu_custom_call.1} parent=0 // pred_check
    %p33 = pneg %p29
  $region23: #{tpu_custom_call.1} parent=0 // pred_check_branch
    %35 = sbr.rel (%p33) target = $region25
  $region24: #{tpu_custom_call.1} parent=0 // pred_region
    %s36 = sshllo.u32 0, 1
    loop: start=0, step=1, limit=1
    $region26: #{tpu_custom_call.1} parent=24 // loop_pre_header
      _
    $region27: #{tpu_custom_call.1} parent=24 // loop_header
      %s38 = sphi 0, %s42
      %p39 = scmp.ge.s32.totalorder %s38, 1
      %s43 = sphi %s27, %s27
      %s44 = sphi [#allocation2], [#allocation2]
    $region28: #{tpu_custom_call.1} parent=24 // loop_header_branch
      %41 = sbr.rel (%p39) target = $region32
    $region29: #{tpu_custom_call.1} parent=24 // loop_body
      %v45 = vld [vmem:[%s43] sm:%s36]
      %46 = vst [vmem:[%s44] sm:%s36] %v45
    $region30: #{tpu_custom_call.1} parent=24 // loop_footer
      %s42 = sadd.s32 1, %s38
    $region31: #{tpu_custom_call.1} parent=24 // loop_footer_branch
      %37 = sbr.rel target = $region27
    $region32: #{tpu_custom_call.1} parent=24 // loop_exit
      _
  $region25: #{tpu_custom_call.1} parent=0 // pred_fallthru
    _
  // Predicated region
  $region44: #{tpu_custom_call.1} parent=0 // pred_check
    _
  $region45: #{tpu_custom_call.1} parent=0 // pred_check_branch
    %70 = sbr.rel (0) target = $region47
  $region46: #{tpu_custom_call.1} parent=0 // pred_region
    %71 = vsyncadd [#allocation3], 16
  $region47: #{tpu_custom_call.1} parent=0 // pred_fallthru
    _
  %s72 = sadd.s32 %s25, 1
  %s73 = sld [smem:[#allocation5 + %s72]]
  %s74 = scalar_lea.vmem %s1, %s73
  %s75 = scalar_lea.vmem [#allocation2], 1
  %s76 = scalar_lea.sflag [#allocation3], 1
  %p78 = scmp.lt.u32.totalorder 1, 8
  %p79 = pneg %p78
  // Predicated region
  $region48: #{tpu_custom_call.1} parent=0 // pred_check
    _
  $region49: #{tpu_custom_call.1} parent=0 // pred_check_branch
    %81 = sbr.rel (%p78) target = $region51
  $region50: #{tpu_custom_call.1} parent=0 // pred_region
    %s96 = sand.u32 1, 7
    %p97 = scmp.eq.s32.totalorder %s96, 0
    %p98 = pneg %p97
    // Predicated region
    $region63: #{tpu_custom_call.1} parent=50 // pred_check
      _
    $region64: #{tpu_custom_call.1} parent=50 // pred_check_branch
      %100 = sbr.rel (%p97) target = $region66
    $region65: #{tpu_custom_call.1} parent=50 // pred_region
      %s101 = sand.u32 1, 7
      %s102 = ssub.s32 1, %s101
      %s103 = scalar_lea.vmem %s74, %s102
      %s104 = ssub.s32 1, %s101
      %s105 = scalar_lea.vmem %s75, %s104 [#allocation2]
      %s106 = sshllo.u32 0, %s101
      loop: start=0, step=1, limit=1
      $region67: #{tpu_custom_call.1} parent=65 // loop_pre_header
        _
      $region68: #{tpu_custom_call.1} parent=65 // loop_header
        %s108 = sphi 0, %s112
        %p109 = scmp.ge.s32.totalorder %s108, 1
        %s113 = sphi %s103, %s103
        %s114 = sphi %s105, %s105
      $region69: #{tpu_custom_call.1} parent=65 // loop_header_branch
        %111 = sbr.rel (%p109) target = $region73
      $region70: #{tpu_custom_call.1} parent=65 // loop_body
        %v115 = vld [vmem:[%s113] sm:%s106]
        %116 = vst [vmem:[%s114] sm:%s106] %v115
      $region71: #{tpu_custom_call.1} parent=65 // loop_footer
        %s112 = sadd.s32 1, %s108
      $region72: #{tpu_custom_call.1} parent=65 // loop_footer_branch
        %107 = sbr.rel target = $region68
      $region73: #{tpu_custom_call.1} parent=65 // loop_exit
        _
    $region66: #{tpu_custom_call.1} parent=50 // pred_fallthru
      _
  $region51: #{tpu_custom_call.1} parent=0 // pred_fallthru
    _
  // Predicated region
  $region52: #{tpu_custom_call.1} parent=0 // pred_check
    %p82 = pneg %p78
  $region53: #{tpu_custom_call.1} parent=0 // pred_check_branch
    %84 = sbr.rel (%p82) target = $region55
  $region54: #{tpu_custom_call.1} parent=0 // pred_region
    %s85 = sshllo.u32 0, 1
    loop: start=0, step=1, limit=1
    $region56: #{tpu_custom_call.1} parent=54 // loop_pre_header
      _
    $region57: #{tpu_custom_call.1} parent=54 // loop_header
      %s87 = sphi 0, %s91
      %p88 = scmp.ge.s32.totalorder %s87, 1
      %s92 = sphi %s74, %s74
      %s93 = sphi %s75, %s75
    $region58: #{tpu_custom_call.1} parent=54 // loop_header_branch
      %90 = sbr.rel (%p88) target = $region62
    $region59: #{tpu_custom_call.1} parent=54 // loop_body
      %v94 = vld [vmem:[%s92] sm:%s85]
      %95 = vst [vmem:[%s93] sm:%s85] %v94
    $region60: #{tpu_custom_call.1} parent=54 // loop_footer
      %s91 = sadd.s32 1, %s87
    $region61: #{tpu_custom_call.1} parent=54 // loop_footer_branch
      %86 = sbr.rel target = $region57
    $region62: #{tpu_custom_call.1} parent=54 // loop_exit
      _
  $region55: #{tpu_custom_call.1} parent=0 // pred_fallthru
    _
  // Predicated region
  $region74: #{tpu_custom_call.1} parent=0 // pred_check
    _
  $region75: #{tpu_custom_call.1} parent=0 // pred_check_branch
    %119 = sbr.rel (0) target = $region77
  $region76: #{tpu_custom_call.1} parent=0 // pred_region
    %120 = vsyncadd %s76, 16
  $region77: #{tpu_custom_call.1} parent=0 // pred_fallthru
    _
  %s121 = sadd.s32 %s25, 2
  %s122 = sld [smem:[#allocation5 + %s121]]
  %s123 = scalar_lea.vmem %s1, %s122
  %s124 = scalar_lea.vmem [#allocation2], 2
  %s125 = scalar_lea.sflag [#allocation3], 2
  %p127 = scmp.lt.u32.totalorder 1, 8
  %p128 = pneg %p127
  // Predicated region
  $region78: #{tpu_custom_call.1} parent=0 // pred_check
    _
  $region79: #{tpu_custom_call.1} parent=0 // pred_check_branch
    %130 = sbr.rel (%p127) target = $region81
  $region80: #{tpu_custom_call.1} parent=0 // pred_region
    %s145 = sand.u32 1, 7
    %p146 = scmp.eq.s32.totalorder %s145, 0
    %p147 = pneg %p146
    // Predicated region
    $region93: #{tpu_custom_call.1} parent=80 // pred_check
      _
    $region94: #{tpu_custom_call.1} parent=80 // pred_check_branch
      %149 = sbr.rel (%p146) target = $region96
    $region95: #{tpu_custom_call.1} parent=80 // pred_region
      %s150 = sand.u32 1, 7
      %s151 = ssub.s32 1, %s150
      %s152 = scalar_lea.vmem %s123, %s151
      %s153 = ssub.s32 1, %s150
      %s154 = scalar_lea.vmem %s124, %s153 [#allocation2]
      %s155 = sshllo.u32 0, %s150
      loop: start=0, step=1, limit=1
      $region97: #{tpu_custom_call.1} parent=95 // loop_pre_header
        _
      $region98: #{tpu_custom_call.1} parent=95 // loop_header
        %s157 = sphi 0, %s161
        %p158 = scmp.ge.s32.totalorder %s157, 1
        %s162 = sphi %s152, %s152
        %s163 = sphi %s154, %s154
      $region99: #{tpu_custom_call.1} parent=95 // loop_header_branch
        %160 = sbr.rel (%p158) target = $region103
      $region100: #{tpu_custom_call.1} parent=95 // loop_body
        %v164 = vld [vmem:[%s162] sm:%s155]
        %165 = vst [vmem:[%s163] sm:%s155] %v164
      $region101: #{tpu_custom_call.1} parent=95 // loop_footer
        %s161 = sadd.s32 1, %s157
      $region102: #{tpu_custom_call.1} parent=95 // loop_footer_branch
        %156 = sbr.rel target = $region98
      $region103: #{tpu_custom_call.1} parent=95 // loop_exit
        _
    $region96: #{tpu_custom_call.1} parent=80 // pred_fallthru
      _
  $region81: #{tpu_custom_call.1} parent=0 // pred_fallthru
    _
  // Predicated region
  $region82: #{tpu_custom_call.1} parent=0 // pred_check
    %p131 = pneg %p127
  $region83: #{tpu_custom_call.1} parent=0 // pred_check_branch
    %133 = sbr.rel (%p131) target = $region85
  $region84: #{tpu_custom_call.1} parent=0 // pred_region
    %s134 = sshllo.u32 0, 1
    loop: start=0, step=1, limit=1
    $region86: #{tpu_custom_call.1} parent=84 // loop_pre_header
      _
    $region87: #{tpu_custom_call.1} parent=84 // loop_header
      %s136 = sphi 0, %s140
      %p137 = scmp.ge.s32.totalorder %s136, 1
      %s141 = sphi %s123, %s123
      %s142 = sphi %s124, %s124
    $region88: #{tpu_custom_call.1} parent=84 // loop_header_branch
      %139 = sbr.rel (%p137) target = $region92
    $region89: #{tpu_custom_call.1} parent=84 // loop_body
      %v143 = vld [vmem:[%s141] sm:%s134]
      %144 = vst [vmem:[%s142] sm:%s134] %v143
    $region90: #{tpu_custom_call.1} parent=84 // loop_footer
      %s140 = sadd.s32 1, %s136
    $region91: #{tpu_custom_call.1} parent=84 // loop_footer_branch
      %135 = sbr.rel target = $region87
    $region92: #{tpu_custom_call.1} parent=84 // loop_exit
      _
  $region85: #{tpu_custom_call.1} parent=0 // pred_fallthru
    _
  // Predicated region
  $region104: #{tpu_custom_call.1} parent=0 // pred_check
    _
  $region105: #{tpu_custom_call.1} parent=0 // pred_check_branch
    %168 = sbr.rel (0) target = $region107
  $region106: #{tpu_custom_call.1} parent=0 // pred_region
    %169 = vsyncadd %s125, 16
  $region107: #{tpu_custom_call.1} parent=0 // pred_fallthru
    _
  %s170 = sadd.s32 %s25, 3
  %s171 = sld [smem:[#allocation5 + %s170]]
  %s172 = scalar_lea.vmem %s1, %s171
  %s173 = scalar_lea.vmem [#allocation2], 3
  %s174 = scalar_lea.sflag [#allocation3], 3
  %p176 = scmp.lt.u32.totalorder 1, 8
  %p177 = pneg %p176
  // Predicated region
  $region108: #{tpu_custom_call.1} parent=0 // pred_check
    _
  $region109: #{tpu_custom_call.1} parent=0 // pred_check_branch
    %179 = sbr.rel (%p176) target = $region111
  $region110: #{tpu_custom_call.1} parent=0 // pred_region
    %s194 = sand.u32 1, 7
    %p195 = scmp.eq.s32.totalorder %s194, 0
    %p196 = pneg %p195
    // Predicated region
    $region123: #{tpu_custom_call.1} parent=110 // pred_check
      _
    $region124: #{tpu_custom_call.1} parent=110 // pred_check_branch
      %198 = sbr.rel (%p195) target = $region126
    $region125: #{tpu_custom_call.1} parent=110 // pred_region
      %s199 = sand.u32 1, 7
      %s200 = ssub.s32 1, %s199
      %s201 = scalar_lea.vmem %s172, %s200
      %s202 = ssub.s32 1, %s199
      %s203 = scalar_lea.vmem %s173, %s202 [#allocation2]
      %s204 = sshllo.u32 0, %s199
      loop: start=0, step=1, limit=1
      $region127: #{tpu_custom_call.1} parent=125 // loop_pre_header
        _
      $region128: #{tpu_custom_call.1} parent=125 // loop_header
        %s206 = sphi 0, %s210
        %p207 = scmp.ge.s32.totalorder %s206, 1
        %s211 = sphi %s201, %s201
        %s212 = sphi %s203, %s203
      $region129: #{tpu_custom_call.1} parent=125 // loop_header_branch
        %209 = sbr.rel (%p207) target = $region133
      $region130: #{tpu_custom_call.1} parent=125 // loop_body
        %v213 = vld [vmem:[%s211] sm:%s204]
        %214 = vst [vmem:[%s212] sm:%s204] %v213
      $region131: #{tpu_custom_call.1} parent=125 // loop_footer
        %s210 = sadd.s32 1, %s206
      $region132: #{tpu_custom_call.1} parent=125 // loop_footer_branch
        %205 = sbr.rel target = $region128
      $region133: #{tpu_custom_call.1} parent=125 // loop_exit
        _
    $region126: #{tpu_custom_call.1} parent=110 // pred_fallthru
      _
  $region111: #{tpu_custom_call.1} parent=0 // pred_fallthru
    _
  // Predicated region
  $region112: #{tpu_custom_call.1} parent=0 // pred_check
    %p180 = pneg %p176
  $region113: #{tpu_custom_call.1} parent=0 // pred_check_branch
    %182 = sbr.rel (%p180) target = $region115
  $region114: #{tpu_custom_call.1} parent=0 // pred_region
    %s183 = sshllo.u32 0, 1
    loop: start=0, step=1, limit=1
    $region116: #{tpu_custom_call.1} parent=114 // loop_pre_header
      _
    $region117: #{tpu_custom_call.1} parent=114 // loop_header
      %s185 = sphi 0, %s189
      %p186 = scmp.ge.s32.totalorder %s185, 1
      %s190 = sphi %s172, %s172
      %s191 = sphi %s173, %s173
    $region118: #{tpu_custom_call.1} parent=114 // loop_header_branch
      %188 = sbr.rel (%p186) target = $region122
    $region119: #{tpu_custom_call.1} parent=114 // loop_body
      %v192 = vld [vmem:[%s190] sm:%s183]
      %193 = vst [vmem:[%s191] sm:%s183] %v192
    $region120: #{tpu_custom_call.1} parent=114 // loop_footer
      %s189 = sadd.s32 1, %s185
    $region121: #{tpu_custom_call.1} parent=114 // loop_footer_branch
      %184 = sbr.rel target = $region117
    $region122: #{tpu_custom_call.1} parent=114 // loop_exit
      _
  $region115: #{tpu_custom_call.1} parent=0 // pred_fallthru
    _
  // Predicated region
  $region134: #{tpu_custom_call.1} parent=0 // pred_check
    _
  $region135: #{tpu_custom_call.1} parent=0 // pred_check_branch
    %217 = sbr.rel (0) target = $region137
  $region136: #{tpu_custom_call.1} parent=0 // pred_region
    %218 = vsyncadd %s174, 16
  $region137: #{tpu_custom_call.1} parent=0 // pred_fallthru
    _
  %s219 = sadd.s32 %s25, 4
  %s220 = sld [smem:[#allocation5 + %s219]]
  %s221 = scalar_lea.vmem %s1, %s220
  %s222 = scalar_lea.vmem [#allocation2], 4
  %s223 = scalar_lea.sflag [#allocation3], 4
  %p225 = scmp.lt.u32.totalorder 1, 8
  %p226 = pneg %p225
  // Predicated region
  $region138: #{tpu_custom_call.1} parent=0 // pred_check
    _
  $region139: #{tpu_custom_call.1} parent=0 // pred_check_branch
    %228 = sbr.rel (%p225) target = $region141
  $region140: #{tpu_custom_call.1} parent=0 // pred_region
    %s243 = sand.u32 1, 7
    %p244 = scmp.eq.s32.totalorder %s243, 0
    %p245 = pneg %p244
    // Predicated region
    $region153: #{tpu_custom_call.1} parent=140 // pred_check
      _
    $region154: #{tpu_custom_call.1} parent=140 // pred_check_branch
      %247 = sbr.rel (%p244) target = $region156
    $region155: #{tpu_custom_call.1} parent=140 // pred_region
      %s248 = sand.u32 1, 7
      %s249 = ssub.s32 1, %s248
      %s250 = scalar_lea.vmem %s221, %s249
      %s251 = ssub.s32 1, %s248
      %s252 = scalar_lea.vmem %s222, %s251 [#allocation2]
      %s253 = sshllo.u32 0, %s248
      loop: start=0, step=1, limit=1
      $region157: #{tpu_custom_call.1} parent=155 // loop_pre_header
        _
      $region158: #{tpu_custom_call.1} parent=155 // loop_header
        %s255 = sphi 0, %s259
        %p256 = scmp.ge.s32.totalorder %s255, 1
        %s260 = sphi %s250, %s250
        %s261 = sphi %s252, %s252
      $region159: #{tpu_custom_call.1} parent=155 // loop_header_branch
        %258 = sbr.rel (%p256) target = $region163
      $region160: #{tpu_custom_call.1} parent=155 // loop_body
        %v262 = vld [vmem:[%s260] sm:%s253]
        %263 = vst [vmem:[%s261] sm:%s253] %v262
      $region161: #{tpu_custom_call.1} parent=155 // loop_footer
        %s259 = sadd.s32 1, %s255
      $region162: #{tpu_custom_call.1} parent=155 // loop_footer_branch
        %254 = sbr.rel target = $region158
      $region163: #{tpu_custom_call.1} parent=155 // loop_exit
        _
    $region156: #{tpu_custom_call.1} parent=140 // pred_fallthru
      _
  $region141: #{tpu_custom_call.1} parent=0 // pred_fallthru
    _
  // Predicated region
  $region142: #{tpu_custom_call.1} parent=0 // pred_check
    %p229 = pneg %p225
  $region143: #{tpu_custom_call.1} parent=0 // pred_check_branch
    %231 = sbr.rel (%p229) target = $region145
  $region144: #{tpu_custom_call.1} parent=0 // pred_region
    %s232 = sshllo.u32 0, 1
    loop: start=0, step=1, limit=1
    $region146: #{tpu_custom_call.1} parent=144 // loop_pre_header
      _
    $region147: #{tpu_custom_call.1} parent=144 // loop_header
      %s234 = sphi 0, %s238
      %p235 = scmp.ge.s32.totalorder %s234, 1
      %s239 = sphi %s221, %s221
      %s240 = sphi %s222, %s222
    $region148: #{tpu_custom_call.1} parent=144 // loop_header_branch
      %237 = sbr.rel (%p235) target = $region152
    $region149: #{tpu_custom_call.1} parent=144 // loop_body
      %v241 = vld [vmem:[%s239] sm:%s232]
      %242 = vst [vmem:[%s240] sm:%s232] %v241
    $region150: #{tpu_custom_call.1} parent=144 // loop_footer
      %s238 = sadd.s32 1, %s234
    $region151: #{tpu_custom_call.1} parent=144 // loop_footer_branch
      %233 = sbr.rel target = $region147
    $region152: #{tpu_custom_call.1} parent=144 // loop_exit
      _
  $region145: #{tpu_custom_call.1} parent=0 // pred_fallthru
    _
  // Predicated region
  $region164: #{tpu_custom_call.1} parent=0 // pred_check
    _
  $region165: #{tpu_custom_call.1} parent=0 // pred_check_branch
    %266 = sbr.rel (0) target = $region167
  $region166: #{tpu_custom_call.1} parent=0 // pred_region
    %267 = vsyncadd %s223, 16
  $region167: #{tpu_custom_call.1} parent=0 // pred_fallthru
    _
  %s268 = sadd.s32 %s25, 5
  %s269 = sld [smem:[#allocation5 + %s268]]
  %s270 = scalar_lea.vmem %s1, %s269
  %s271 = scalar_lea.vmem [#allocation2], 5
  %s272 = scalar_lea.sflag [#allocation3], 5
  %p274 = scmp.lt.u32.totalorder 1, 8
  %p275 = pneg %p274
  // Predicated region
  $region168: #{tpu_custom_call.1} parent=0 // pred_check
    _
  $region169: #{tpu_custom_call.1} parent=0 // pred_check_branch
    %277 = sbr.rel (%p274) target = $region171
  $region170: #{tpu_custom_call.1} parent=0 // pred_region
    %s292 = sand.u32 1, 7
    %p293 = scmp.eq.s32.totalorder %s292, 0
    %p294 = pneg %p293
    // Predicated region
    $region183: #{tpu_custom_call.1} parent=170 // pred_check
      _
    $region184: #{tpu_custom_call.1} parent=170 // pred_check_branch
      %296 = sbr.rel (%p293) target = $region186
    $region185: #{tpu_custom_call.1} parent=170 // pred_region
      %s297 = sand.u32 1, 7
      %s298 = ssub.s32 1, %s297
      %s299 = scalar_lea.vmem %s270, %s298
      %s300 = ssub.s32 1, %s297
      %s301 = scalar_lea.vmem %s271, %s300 [#allocation2]
      %s302 = sshllo.u32 0, %s297
      loop: start=0, step=1, limit=1
      $region187: #{tpu_custom_call.1} parent=185 // loop_pre_header
        _
      $region188: #{tpu_custom_call.1} parent=185 // loop_header
        %s304 = sphi 0, %s308
        %p305 = scmp.ge.s32.totalorder %s304, 1
        %s309 = sphi %s299, %s299
        %s310 = sphi %s301, %s301
      $region189: #{tpu_custom_call.1} parent=185 // loop_header_branch
        %307 = sbr.rel (%p305) target = $region193
      $region190: #{tpu_custom_call.1} parent=185 // loop_body
        %v311 = vld [vmem:[%s309] sm:%s302]
        %312 = vst [vmem:[%s310] sm:%s302] %v311
      $region191: #{tpu_custom_call.1} parent=185 // loop_footer
        %s308 = sadd.s32 1, %s304
      $region192: #{tpu_custom_call.1} parent=185 // loop_footer_branch
        %303 = sbr.rel target = $region188
      $region193: #{tpu_custom_call.1} parent=185 // loop_exit
        _
    $region186: #{tpu_custom_call.1} parent=170 // pred_fallthru
      _
  $region171: #{tpu_custom_call.1} parent=0 // pred_fallthru
    _
  // Predicated region
  $region172: #{tpu_custom_call.1} parent=0 // pred_check
    %p278 = pneg %p274
  $region173: #{tpu_custom_call.1} parent=0 // pred_check_branch
    %280 = sbr.rel (%p278) target = $region175
  $region174: #{tpu_custom_call.1} parent=0 // pred_region
    %s281 = sshllo.u32 0, 1
    loop: start=0, step=1, limit=1
    $region176: #{tpu_custom_call.1} parent=174 // loop_pre_header
      _
    $region177: #{tpu_custom_call.1} parent=174 // loop_header
      %s283 = sphi 0, %s287
      %p284 = scmp.ge.s32.totalorder %s283, 1
      %s288 = sphi %s270, %s270
      %s289 = sphi %s271, %s271
    $region178: #{tpu_custom_call.1} parent=174 // loop_header_branch
      %286 = sbr.rel (%p284) target = $region182
    $region179: #{tpu_custom_call.1} parent=174 // loop_body
      %v290 = vld [vmem:[%s288] sm:%s281]
      %291 = vst [vmem:[%s289] sm:%s281] %v290
    $region180: #{tpu_custom_call.1} parent=174 // loop_footer
      %s287 = sadd.s32 1, %s283
    $region181: #{tpu_custom_call.1} parent=174 // loop_footer_branch
      %282 = sbr.rel target = $region177
    $region182: #{tpu_custom_call.1} parent=174 // loop_exit
      _
  $region175: #{tpu_custom_call.1} parent=0 // pred_fallthru
    _
  // Predicated region
  $region194: #{tpu_custom_call.1} parent=0 // pred_check
    _
  $region195: #{tpu_custom_call.1} parent=0 // pred_check_branch
    %315 = sbr.rel (0) target = $region197
  $region196: #{tpu_custom_call.1} parent=0 // pred_region
    %316 = vsyncadd %s272, 16
  $region197: #{tpu_custom_call.1} parent=0 // pred_fallthru
    _
  %s317 = sadd.s32 %s25, 6
  %s318 = sld [smem:[#allocation5 + %s317]]
  %s319 = scalar_lea.vmem %s1, %s318
  %s320 = scalar_lea.vmem [#allocation2], 6
  %s321 = scalar_lea.sflag [#allocation3], 6
  %p323 = scmp.lt.u32.totalorder 1, 8
  %p324 = pneg %p323
  // Predicated region
  $region198: #{tpu_custom_call.1} parent=0 // pred_check
    _
  $region199: #{tpu_custom_call.1} parent=0 // pred_check_branch
    %326 = sbr.rel (%p323) target = $region201
  $region200: #{tpu_custom_call.1} parent=0 // pred_region
    %s341 = sand.u32 1, 7
    %p342 = scmp.eq.s32.totalorder %s341, 0
    %p343 = pneg %p342
    // Predicated region
    $region213: #{tpu_custom_call.1} parent=200 // pred_check
      _
    $region214: #{tpu_custom_call.1} parent=200 // pred_check_branch
      %345 = sbr.rel (%p342) target = $region216
    $region215: #{tpu_custom_call.1} parent=200 // pred_region
      %s346 = sand.u32 1, 7
      %s347 = ssub.s32 1, %s346
      %s348 = scalar_lea.vmem %s319, %s347
      %s349 = ssub.s32 1, %s346
      %s350 = scalar_lea.vmem %s320, %s349 [#allocation2]
      %s351 = sshllo.u32 0, %s346
      loop: start=0, step=1, limit=1
      $region217: #{tpu_custom_call.1} parent=215 // loop_pre_header
        _
      $region218: #{tpu_custom_call.1} parent=215 // loop_header
        %s353 = sphi 0, %s357
        %p354 = scmp.ge.s32.totalorder %s353, 1
        %s358 = sphi %s348, %s348
        %s359 = sphi %s350, %s350
      $region219: #{tpu_custom_call.1} parent=215 // loop_header_branch
        %356 = sbr.rel (%p354) target = $region223
      $region220: #{tpu_custom_call.1} parent=215 // loop_body
        %v360 = vld [vmem:[%s358] sm:%s351]
        %361 = vst [vmem:[%s359] sm:%s351] %v360
      $region221: #{tpu_custom_call.1} parent=215 // loop_footer
        %s357 = sadd.s32 1, %s353
      $region222: #{tpu_custom_call.1} parent=215 // loop_footer_branch
        %352 = sbr.rel target = $region218
      $region223: #{tpu_custom_call.1} parent=215 // loop_exit
        _
    $region216: #{tpu_custom_call.1} parent=200 // pred_fallthru
      _
  $region201: #{tpu_custom_call.1} parent=0 // pred_fallthru
    _
  // Predicated region
  $region202: #{tpu_custom_call.1} parent=0 // pred_check
    %p327 = pneg %p323
  $region203: #{tpu_custom_call.1} parent=0 // pred_check_branch
    %329 = sbr.rel (%p327) target = $region205
  $region204: #{tpu_custom_call.1} parent=0 // pred_region
    %s330 = sshllo.u32 0, 1
    loop: start=0, step=1, limit=1
    $region206: #{tpu_custom_call.1} parent=204 // loop_pre_header
      _
    $region207: #{tpu_custom_call.1} parent=204 // loop_header
      %s332 = sphi 0, %s336
      %p333 = scmp.ge.s32.totalorder %s332, 1
      %s337 = sphi %s319, %s319
      %s338 = sphi %s320, %s320
    $region208: #{tpu_custom_call.1} parent=204 // loop_header_branch
      %335 = sbr.rel (%p333) target = $region212
    $region209: #{tpu_custom_call.1} parent=204 // loop_body
      %v339 = vld [vmem:[%s337] sm:%s330]
      %340 = vst [vmem:[%s338] sm:%s330] %v339
    $region210: #{tpu_custom_call.1} parent=204 // loop_footer
      %s336 = sadd.s32 1, %s332
    $region211: #{tpu_custom_call.1} parent=204 // loop_footer_branch
      %331 = sbr.rel target = $region207
    $region212: #{tpu_custom_call.1} parent=204 // loop_exit
      _
  $region205: #{tpu_custom_call.1} parent=0 // pred_fallthru
    _
  // Predicated region
  $region224: #{tpu_custom_call.1} parent=0 // pred_check
    _
  $region225: #{tpu_custom_call.1} parent=0 // pred_check_branch
    %364 = sbr.rel (0) target = $region227
  $region226: #{tpu_custom_call.1} parent=0 // pred_region
    %365 = vsyncadd %s321, 16
  $region227: #{tpu_custom_call.1} parent=0 // pred_fallthru
    _
  %s366 = sadd.s32 %s25, 7
  %s367 = sld [smem:[#allocation5 + %s366]]
  %s368 = scalar_lea.vmem %s1, %s367
  %s369 = scalar_lea.vmem [#allocation2], 7
  %s370 = scalar_lea.sflag [#allocation3], 7
  %p372 = scmp.lt.u32.totalorder 1, 8
  %p373 = pneg %p372
  // Predicated region
  $region228: #{tpu_custom_call.1} parent=0 // pred_check
    _
  $region229: #{tpu_custom_call.1} parent=0 // pred_check_branch
    %375 = sbr.rel (%p372) target = $region231
  $region230: #{tpu_custom_call.1} parent=0 // pred_region
    %s390 = sand.u32 1, 7
    %p391 = scmp.eq.s32.totalorder %s390, 0
    %p392 = pneg %p391
    // Predicated region
    $region243: #{tpu_custom_call.1} parent=230 // pred_check
      _
    $region244: #{tpu_custom_call.1} parent=230 // pred_check_branch
      %394 = sbr.rel (%p391) target = $region246
    $region245: #{tpu_custom_call.1} parent=230 // pred_region
      %s395 = sand.u32 1, 7
      %s396 = ssub.s32 1, %s395
      %s397 = scalar_lea.vmem %s368, %s396
      %s398 = ssub.s32 1, %s395
      %s399 = scalar_lea.vmem %s369, %s398 [#allocation2]
      %s400 = sshllo.u32 0, %s395
      loop: start=0, step=1, limit=1
      $region247: #{tpu_custom_call.1} parent=245 // loop_pre_header
        _
      $region248: #{tpu_custom_call.1} parent=245 // loop_header
        %s402 = sphi 0, %s406
        %p403 = scmp.ge.s32.totalorder %s402, 1
        %s407 = sphi %s397, %s397
        %s408 = sphi %s399, %s399
      $region249: #{tpu_custom_call.1} parent=245 // loop_header_branch
        %405 = sbr.rel (%p403) target = $region253
      $region250: #{tpu_custom_call.1} parent=245 // loop_body
        %v409 = vld [vmem:[%s407] sm:%s400]
        %410 = vst [vmem:[%s408] sm:%s400] %v409
      $region251: #{tpu_custom_call.1} parent=245 // loop_footer
        %s406 = sadd.s32 1, %s402
      $region252: #{tpu_custom_call.1} parent=245 // loop_footer_branch
        %401 = sbr.rel target = $region248
      $region253: #{tpu_custom_call.1} parent=245 // loop_exit
        _
    $region246: #{tpu_custom_call.1} parent=230 // pred_fallthru
      _
  $region231: #{tpu_custom_call.1} parent=0 // pred_fallthru
    _
  // Predicated region
  $region232: #{tpu_custom_call.1} parent=0 // pred_check
    %p376 = pneg %p372
  $region233: #{tpu_custom_call.1} parent=0 // pred_check_branch
    %378 = sbr.rel (%p376) target = $region235
  $region234: #{tpu_custom_call.1} parent=0 // pred_region
    %s379 = sshllo.u32 0, 1
    loop: start=0, step=1, limit=1
    $region236: #{tpu_custom_call.1} parent=234 // loop_pre_header
      _
    $region237: #{tpu_custom_call.1} parent=234 // loop_header
      %s381 = sphi 0, %s385
      %p382 = scmp.ge.s32.totalorder %s381, 1
      %s386 = sphi %s368, %s368
      %s387 = sphi %s369, %s369
    $region238: #{tpu_custom_call.1} parent=234 // loop_header_branch
      %384 = sbr.rel (%p382) target = $region242
    $region239: #{tpu_custom_call.1} parent=234 // loop_body
      %v388 = vld [vmem:[%s386] sm:%s379]
      %389 = vst [vmem:[%s387] sm:%s379] %v388
    $region240: #{tpu_custom_call.1} parent=234 // loop_footer
      %s385 = sadd.s32 1, %s381
    $region241: #{tpu_custom_call.1} parent=234 // loop_footer_branch
      %380 = sbr.rel target = $region237
    $region242: #{tpu_custom_call.1} parent=234 // loop_exit
      _
  $region235: #{tpu_custom_call.1} parent=0 // pred_fallthru
    _
  // Predicated region
  $region254: #{tpu_custom_call.1} parent=0 // pred_check
    _
  $region255: #{tpu_custom_call.1} parent=0 // pred_check_branch
    %413 = sbr.rel (0) target = $region257
  $region256: #{tpu_custom_call.1} parent=0 // pred_region
    %414 = vsyncadd %s370, 16
  $region257: #{tpu_custom_call.1} parent=0 // pred_fallthru
    _
  %s415 = sadd.s32 %s25, 8
  %s416 = sld [smem:[#allocation5 + %s415]]
  %s417 = scalar_lea.vmem %s1, %s416
  %s418 = scalar_lea.vmem [#allocation2], 8
  %s419 = scalar_lea.sflag [#allocation3], 8
  %p421 = scmp.lt.u32.totalorder 1, 8
  %p422 = pneg %p421
  // Predicated region
  $region258: #{tpu_custom_call.1} parent=0 // pred_check
    _
  $region259: #{tpu_custom_call.1} parent=0 // pred_check_branch
    %424 = sbr.rel (%p421) target = $region261
  $region260: #{tpu_custom_call.1} parent=0 // pred_region
    %s439 = sand.u32 1, 7
    %p440 = scmp.eq.s32.totalorder %s439, 0
    %p441 = pneg %p440
    // Predicated region
    $region273: #{tpu_custom_call.1} parent=260 // pred_check
      _
    $region274: #{tpu_custom_call.1} parent=260 // pred_check_branch
      %443 = sbr.rel (%p440) target = $region276
    $region275: #{tpu_custom_call.1} parent=260 // pred_region
      %s444 = sand.u32 1, 7
      %s445 = ssub.s32 1, %s444
      %s446 = scalar_lea.vmem %s417, %s445
      %s447 = ssub.s32 1, %s444
      %s448 = scalar_lea.vmem %s418, %s447 [#allocation2]
      %s449 = sshllo.u32 0, %s444
      loop: start=0, step=1, limit=1
      $region277: #{tpu_custom_call.1} parent=275 // loop_pre_header
        _
      $region278: #{tpu_custom_call.1} parent=275 // loop_header
        %s451 = sphi 0, %s455
        %p452 = scmp.ge.s32.totalorder %s451, 1
        %s456 = sphi %s446, %s446
        %s457 = sphi %s448, %s448
      $region279: #{tpu_custom_call.1} parent=275 // loop_header_branch
        %454 = sbr.rel (%p452) target = $region283
      $region280: #{tpu_custom_call.1} parent=275 // loop_body
        %v458 = vld [vmem:[%s456] sm:%s449]
        %459 = vst [vmem:[%s457] sm:%s449] %v458
      $region281: #{tpu_custom_call.1} parent=275 // loop_footer
        %s455 = sadd.s32 1, %s451
      $region282: #{tpu_custom_call.1} parent=275 // loop_footer_branch
        %450 = sbr.rel target = $region278
      $region283: #{tpu_custom_call.1} parent=275 // loop_exit
        _
    $region276: #{tpu_custom_call.1} parent=260 // pred_fallthru
      _
  $region261: #{tpu_custom_call.1} parent=0 // pred_fallthru
    _
  // Predicated region
  $region262: #{tpu_custom_call.1} parent=0 // pred_check
    %p425 = pneg %p421
  $region263: #{tpu_custom_call.1} parent=0 // pred_check_branch
    %427 = sbr.rel (%p425) target = $region265
  $region264: #{tpu_custom_call.1} parent=0 // pred_region
    %s428 = sshllo.u32 0, 1
    loop: start=0, step=1, limit=1
    $region266: #{tpu_custom_call.1} parent=264 // loop_pre_header
      _
    $region267: #{tpu_custom_call.1} parent=264 // loop_header
      %s430 = sphi 0, %s434
      %p431 = scmp.ge.s32.totalorder %s430, 1
      %s435 = sphi %s417, %s417
      %s436 = sphi %s418, %s418
    $region268: #{tpu_custom_call.1} parent=264 // loop_header_branch
      %433 = sbr.rel (%p431) target = $region272
    $region269: #{tpu_custom_call.1} parent=264 // loop_body
      %v437 = vld [vmem:[%s435] sm:%s428]
      %438 = vst [vmem:[%s436] sm:%s428] %v437
    $region270: #{tpu_custom_call.1} parent=264 // loop_footer
      %s434 = sadd.s32 1, %s430
    $region271: #{tpu_custom_call.1} parent=264 // loop_footer_branch
      %429 = sbr.rel target = $region267
    $region272: #{tpu_custom_call.1} parent=264 // loop_exit
      _
  $region265: #{tpu_custom_call.1} parent=0 // pred_fallthru
    _
  // Predicated region
  $region284: #{tpu_custom_call.1} parent=0 // pred_check
    _
  $region285: #{tpu_custom_call.1} parent=0 // pred_check_branch
    %462 = sbr.rel (0) target = $region287
  $region286: #{tpu_custom_call.1} parent=0 // pred_region
    %463 = vsyncadd %s419, 16
  $region287: #{tpu_custom_call.1} parent=0 // pred_fallthru
    _
  %s464 = sadd.s32 %s25, 9
  %s465 = sld [smem:[#allocation5 + %s464]]
  %s466 = scalar_lea.vmem %s1, %s465
  %s467 = scalar_lea.vmem [#allocation2], 9
  %s468 = scalar_lea.sflag [#allocation3], 9
  %p470 = scmp.lt.u32.totalorder 1, 8
  %p471 = pneg %p470
  // Predicated region
  $region288: #{tpu_custom_call.1} parent=0 // pred_check
    _
  $region289: #{tpu_custom_call.1} parent=0 // pred_check_branch
    %473 = sbr.rel (%p470) target = $region291
  $region290: #{tpu_custom_call.1} parent=0 // pred_region
    %s488 = sand.u32 1, 7
    %p489 = scmp.eq.s32.totalorder %s488, 0
    %p490 = pneg %p489
    // Predicated region
    $region303: #{tpu_custom_call.1} parent=290 // pred_check
      _
    $region304: #{tpu_custom_call.1} parent=290 // pred_check_branch
      %492 = sbr.rel (%p489) target = $region306
    $region305: #{tpu_custom_call.1} parent=290 // pred_region
      %s493 = sand.u32 1, 7
      %s494 = ssub.s32 1, %s493
      %s495 = scalar_lea.vmem %s466, %s494
      %s496 = ssub.s32 1, %s493
      %s497 = scalar_lea.vmem %s467, %s496 [#allocation2]
      %s498 = sshllo.u32 0, %s493
      loop: start=0, step=1, limit=1
      $region307: #{tpu_custom_call.1} parent=305 // loop_pre_header
        _
      $region308: #{tpu_custom_call.1} parent=305 // loop_header
        %s500 = sphi 0, %s504
        %p501 = scmp.ge.s32.totalorder %s500, 1
        %s505 = sphi %s495, %s495
        %s506 = sphi %s497, %s497
      $region309: #{tpu_custom_call.1} parent=305 // loop_header_branch
        %503 = sbr.rel (%p501) target = $region313
      $region310: #{tpu_custom_call.1} parent=305 // loop_body
        %v507 = vld [vmem:[%s505] sm:%s498]
        %508 = vst [vmem:[%s506] sm:%s498] %v507
      $region311: #{tpu_custom_call.1} parent=305 // loop_footer
        %s504 = sadd.s32 1, %s500
      $region312: #{tpu_custom_call.1} parent=305 // loop_footer_branch
        %499 = sbr.rel target = $region308
      $region313: #{tpu_custom_call.1} parent=305 // loop_exit
        _
    $region306: #{tpu_custom_call.1} parent=290 // pred_fallthru
      _
  $region291: #{tpu_custom_call.1} parent=0 // pred_fallthru
    _
  // Predicated region
  $region292: #{tpu_custom_call.1} parent=0 // pred_check
    %p474 = pneg %p470
  $region293: #{tpu_custom_call.1} parent=0 // pred_check_branch
    %476 = sbr.rel (%p474) target = $region295
  $region294: #{tpu_custom_call.1} parent=0 // pred_region
    %s477 = sshllo.u32 0, 1
    loop: start=0, step=1, limit=1
    $region296: #{tpu_custom_call.1} parent=294 // loop_pre_header
      _
    $region297: #{tpu_custom_call.1} parent=294 // loop_header
      %s479 = sphi 0, %s483
      %p480 = scmp.ge.s32.totalorder %s479, 1
      %s484 = sphi %s466, %s466
      %s485 = sphi %s467, %s467
    $region298: #{tpu_custom_call.1} parent=294 // loop_header_branch
      %482 = sbr.rel (%p480) target = $region302
    $region299: #{tpu_custom_call.1} parent=294 // loop_body
      %v486 = vld [vmem:[%s484] sm:%s477]
      %487 = vst [vmem:[%s485] sm:%s477] %v486
    $region300: #{tpu_custom_call.1} parent=294 // loop_footer
      %s483 = sadd.s32 1, %s479
    $region301: #{tpu_custom_call.1} parent=294 // loop_footer_branch
      %478 = sbr.rel target = $region297
    $region302: #{tpu_custom_call.1} parent=294 // loop_exit
      _
  $region295: #{tpu_custom_call.1} parent=0 // pred_fallthru
    _
  // Predicated region
  $region314: #{tpu_custom_call.1} parent=0 // pred_check
    _
  $region315: #{tpu_custom_call.1} parent=0 // pred_check_branch
    %511 = sbr.rel (0) target = $region317
  $region316: #{tpu_custom_call.1} parent=0 // pred_region
    %512 = vsyncadd %s468, 16
  $region317: #{tpu_custom_call.1} parent=0 // pred_fallthru
    _
  %s513 = sadd.s32 %s25, 10
  %s514 = sld [smem:[#allocation5 + %s513]]
  %s515 = scalar_lea.vmem %s1, %s514
  %s516 = scalar_lea.vmem [#allocation2], 10
  %s517 = scalar_lea.sflag [#allocation3], 10
  %p519 = scmp.lt.u32.totalorder 1, 8
  %p520 = pneg %p519
  // Predicated region
  $region318: #{tpu_custom_call.1} parent=0 // pred_check
    _
  $region319: #{tpu_custom_call.1} parent=0 // pred_check_branch
    %522 = sbr.rel (%p519) target = $region321
  $region320: #{tpu_custom_call.1} parent=0 // pred_region
    %s537 = sand.u32 1, 7
    %p538 = scmp.eq.s32.totalorder %s537, 0
    %p539 = pneg %p538
    // Predicated region
    $region333: #{tpu_custom_call.1} parent=320 // pred_check
      _
    $region334: #{tpu_custom_call.1} parent=320 // pred_check_branch
      %541 = sbr.rel (%p538) target = $region336
    $region335: #{tpu_custom_call.1} parent=320 // pred_region
      %s542 = sand.u32 1, 7
      %s543 = ssub.s32 1, %s542
      %s544 = scalar_lea.vmem %s515, %s543
      %s545 = ssub.s32 1, %s542
      %s546 = scalar_lea.vmem %s516, %s545 [#allocation2]
      %s547 = sshllo.u32 0, %s542
      loop: start=0, step=1, limit=1
      $region337: #{tpu_custom_call.1} parent=335 // loop_pre_header
        _
      $region338: #{tpu_custom_call.1} parent=335 // loop_header
        %s549 = sphi 0, %s553
        %p550 = scmp.ge.s32.totalorder %s549, 1
        %s554 = sphi %s544, %s544
        %s555 = sphi %s546, %s546
      $region339: #{tpu_custom_call.1} parent=335 // loop_header_branch
        %552 = sbr.rel (%p550) target = $region343
      $region340: #{tpu_custom_call.1} parent=335 // loop_body
        %v556 = vld [vmem:[%s554] sm:%s547]
        %557 = vst [vmem:[%s555] sm:%s547] %v556
      $region341: #{tpu_custom_call.1} parent=335 // loop_footer
        %s553 = sadd.s32 1, %s549
      $region342: #{tpu_custom_call.1} parent=335 // loop_footer_branch
        %548 = sbr.rel target = $region338
      $region343: #{tpu_custom_call.1} parent=335 // loop_exit
        _
    $region336: #{tpu_custom_call.1} parent=320 // pred_fallthru
      _
  $region321: #{tpu_custom_call.1} parent=0 // pred_fallthru
    _
  // Predicated region
  $region322: #{tpu_custom_call.1} parent=0 // pred_check
    %p523 = pneg %p519
  $region323: #{tpu_custom_call.1} parent=0 // pred_check_branch
    %525 = sbr.rel (%p523) target = $region325
  $region324: #{tpu_custom_call.1} parent=0 // pred_region
    %s526 = sshllo.u32 0, 1
    loop: start=0, step=1, limit=1
    $region326: #{tpu_custom_call.1} parent=324 // loop_pre_header
      _
    $region327: #{tpu_custom_call.1} parent=324 // loop_header
      %s528 = sphi 0, %s532
      %p529 = scmp.ge.s32.totalorder %s528, 1
      %s533 = sphi %s515, %s515
      %s534 = sphi %s516, %s516
    $region328: #{tpu_custom_call.1} parent=324 // loop_header_branch
      %531 = sbr.rel (%p529) target = $region332
    $region329: #{tpu_custom_call.1} parent=324 // loop_body
      %v535 = vld [vmem:[%s533] sm:%s526]
      %536 = vst [vmem:[%s534] sm:%s526] %v535
    $region330: #{tpu_custom_call.1} parent=324 // loop_footer
      %s532 = sadd.s32 1, %s528
    $region331: #{tpu_custom_call.1} parent=324 // loop_footer_branch
      %527 = sbr.rel target = $region327
    $region332: #{tpu_custom_call.1} parent=324 // loop_exit
      _
  $region325: #{tpu_custom_call.1} parent=0 // pred_fallthru
    _
  // Predicated region
  $region344: #{tpu_custom_call.1} parent=0 // pred_check
    _
  $region345: #{tpu_custom_call.1} parent=0 // pred_check_branch
    %560 = sbr.rel (0) target = $region347
  $region346: #{tpu_custom_call.1} parent=0 // pred_region
    %561 = vsyncadd %s517, 16
  $region347: #{tpu_custom_call.1} parent=0 // pred_fallthru
    _
  %s562 = sadd.s32 %s25, 11
  %s563 = sld [smem:[#allocation5 + %s562]]
  %s564 = scalar_lea.vmem %s1, %s563
  %s565 = scalar_lea.vmem [#allocation2], 11
  %s566 = scalar_lea.sflag [#allocation3], 11
  %p568 = scmp.lt.u32.totalorder 1, 8
  %p569 = pneg %p568
  // Predicated region
  $region348: #{tpu_custom_call.1} parent=0 // pred_check
    _
  $region349: #{tpu_custom_call.1} parent=0 // pred_check_branch
    %571 = sbr.rel (%p568) target = $region351
  $region350: #{tpu_custom_call.1} parent=0 // pred_region
    %s586 = sand.u32 1, 7
    %p587 = scmp.eq.s32.totalorder %s586, 0
    %p588 = pneg %p587
    // Predicated region
    $region363: #{tpu_custom_call.1} parent=350 // pred_check
      _
    $region364: #{tpu_custom_call.1} parent=350 // pred_check_branch
      %590 = sbr.rel (%p587) target = $region366
    $region365: #{tpu_custom_call.1} parent=350 // pred_region
      %s591 = sand.u32 1, 7
      %s592 = ssub.s32 1, %s591
      %s593 = scalar_lea.vmem %s564, %s592
      %s594 = ssub.s32 1, %s591
      %s595 = scalar_lea.vmem %s565, %s594 [#allocation2]
      %s596 = sshllo.u32 0, %s591
      loop: start=0, step=1, limit=1
      $region367: #{tpu_custom_call.1} parent=365 // loop_pre_header
        _
      $region368: #{tpu_custom_call.1} parent=365 // loop_header
        %s598 = sphi 0, %s602
        %p599 = scmp.ge.s32.totalorder %s598, 1
        %s603 = sphi %s593, %s593
        %s604 = sphi %s595, %s595
      $region369: #{tpu_custom_call.1} parent=365 // loop_header_branch
        %601 = sbr.rel (%p599) target = $region373
      $region370: #{tpu_custom_call.1} parent=365 // loop_body
        %v605 = vld [vmem:[%s603] sm:%s596]
        %606 = vst [vmem:[%s604] sm:%s596] %v605
      $region371: #{tpu_custom_call.1} parent=365 // loop_footer
        %s602 = sadd.s32 1, %s598
      $region372: #{tpu_custom_call.1} parent=365 // loop_footer_branch
        %597 = sbr.rel target = $region368
      $region373: #{tpu_custom_call.1} parent=365 // loop_exit
        _
    $region366: #{tpu_custom_call.1} parent=350 // pred_fallthru
      _
  $region351: #{tpu_custom_call.1} parent=0 // pred_fallthru
    _
  // Predicated region
  $region352: #{tpu_custom_call.1} parent=0 // pred_check
    %p572 = pneg %p568
  $region353: #{tpu_custom_call.1} parent=0 // pred_check_branch
    %574 = sbr.rel (%p572) target = $region355
  $region354: #{tpu_custom_call.1} parent=0 // pred_region
    %s575 = sshllo.u32 0, 1
    loop: start=0, step=1, limit=1
    $region356: #{tpu_custom_call.1} parent=354 // loop_pre_header
      _
    $region357: #{tpu_custom_call.1} parent=354 // loop_header
      %s577 = sphi 0, %s581
      %p578 = scmp.ge.s32.totalorder %s577, 1
      %s582 = sphi %s564, %s564
      %s583 = sphi %s565, %s565
    $region358: #{tpu_custom_call.1} parent=354 // loop_header_branch
      %580 = sbr.rel (%p578) target = $region362
    $region359: #{tpu_custom_call.1} parent=354 // loop_body
      %v584 = vld [vmem:[%s582] sm:%s575]
      %585 = vst [vmem:[%s583] sm:%s575] %v584
    $region360: #{tpu_custom_call.1} parent=354 // loop_footer
      %s581 = sadd.s32 1, %s577
    $region361: #{tpu_custom_call.1} parent=354 // loop_footer_branch
      %576 = sbr.rel target = $region357
    $region362: #{tpu_custom_call.1} parent=354 // loop_exit
      _
  $region355: #{tpu_custom_call.1} parent=0 // pred_fallthru
    _
  // Predicated region
  $region374: #{tpu_custom_call.1} parent=0 // pred_check
    _
  $region375: #{tpu_custom_call.1} parent=0 // pred_check_branch
    %609 = sbr.rel (0) target = $region377
  $region376: #{tpu_custom_call.1} parent=0 // pred_region
    %610 = vsyncadd %s566, 16
  $region377: #{tpu_custom_call.1} parent=0 // pred_fallthru
    _
  %s611 = sadd.s32 %s25, 12
  %s612 = sld [smem:[#allocation5 + %s611]]
  %s613 = scalar_lea.vmem %s1, %s612
  %s614 = scalar_lea.vmem [#allocation2], 12
  %s615 = scalar_lea.sflag [#allocation3], 12
  %p617 = scmp.lt.u32.totalorder 1, 8
  %p618 = pneg %p617
  // Predicated region
  $region378: #{tpu_custom_call.1} parent=0 // pred_check
    _
  $region379: #{tpu_custom_call.1} parent=0 // pred_check_branch
    %620 = sbr.rel (%p617) target = $region381
  $region380: #{tpu_custom_call.1} parent=0 // pred_region
    %s635 = sand.u32 1, 7
    %p636 = scmp.eq.s32.totalorder %s635, 0
    %p637 = pneg %p636
    // Predicated region
    $region393: #{tpu_custom_call.1} parent=380 // pred_check
      _
    $region394: #{tpu_custom_call.1} parent=380 // pred_check_branch
      %639 = sbr.rel (%p636) target = $region396
    $region395: #{tpu_custom_call.1} parent=380 // pred_region
      %s640 = sand.u32 1, 7
      %s641 = ssub.s32 1, %s640
      %s642 = scalar_lea.vmem %s613, %s641
      %s643 = ssub.s32 1, %s640
      %s644 = scalar_lea.vmem %s614, %s643 [#allocation2]
      %s645 = sshllo.u32 0, %s640
      loop: start=0, step=1, limit=1
      $region397: #{tpu_custom_call.1} parent=395 // loop_pre_header
        _
      $region398: #{tpu_custom_call.1} parent=395 // loop_header
        %s647 = sphi 0, %s651
        %p648 = scmp.ge.s32.totalorder %s647, 1
        %s652 = sphi %s642, %s642
        %s653 = sphi %s644, %s644
      $region399: #{tpu_custom_call.1} parent=395 // loop_header_branch
        %650 = sbr.rel (%p648) target = $region403
      $region400: #{tpu_custom_call.1} parent=395 // loop_body
        %v654 = vld [vmem:[%s652] sm:%s645]
        %655 = vst [vmem:[%s653] sm:%s645] %v654
      $region401: #{tpu_custom_call.1} parent=395 // loop_footer
        %s651 = sadd.s32 1, %s647
      $region402: #{tpu_custom_call.1} parent=395 // loop_footer_branch
        %646 = sbr.rel target = $region398
      $region403: #{tpu_custom_call.1} parent=395 // loop_exit
        _
    $region396: #{tpu_custom_call.1} parent=380 // pred_fallthru
      _
  $region381: #{tpu_custom_call.1} parent=0 // pred_fallthru
    _
  // Predicated region
  $region382: #{tpu_custom_call.1} parent=0 // pred_check
    %p621 = pneg %p617
  $region383: #{tpu_custom_call.1} parent=0 // pred_check_branch
    %623 = sbr.rel (%p621) target = $region385
  $region384: #{tpu_custom_call.1} parent=0 // pred_region
    %s624 = sshllo.u32 0, 1
    loop: start=0, step=1, limit=1
    $region386: #{tpu_custom_call.1} parent=384 // loop_pre_header
      _
    $region387: #{tpu_custom_call.1} parent=384 // loop_header
      %s626 = sphi 0, %s630
      %p627 = scmp.ge.s32.totalorder %s626, 1
      %s631 = sphi %s613, %s613
      %s632 = sphi %s614, %s614
    $region388: #{tpu_custom_call.1} parent=384 // loop_header_branch
      %629 = sbr.rel (%p627) target = $region392
    $region389: #{tpu_custom_call.1} parent=384 // loop_body
      %v633 = vld [vmem:[%s631] sm:%s624]
      %634 = vst [vmem:[%s632] sm:%s624] %v633
    $region390: #{tpu_custom_call.1} parent=384 // loop_footer
      %s630 = sadd.s32 1, %s626
    $region391: #{tpu_custom_call.1} parent=384 // loop_footer_branch
      %625 = sbr.rel target = $region387
    $region392: #{tpu_custom_call.1} parent=384 // loop_exit
      _
  $region385: #{tpu_custom_call.1} parent=0 // pred_fallthru
    _
  // Predicated region
  $region404: #{tpu_custom_call.1} parent=0 // pred_check
    _
  $region405: #{tpu_custom_call.1} parent=0 // pred_check_branch
    %658 = sbr.rel (0) target = $region407
  $region406: #{tpu_custom_call.1} parent=0 // pred_region
    %659 = vsyncadd %s615, 16
  $region407: #{tpu_custom_call.1} parent=0 // pred_fallthru
    _
  %s660 = sadd.s32 %s25, 13
  %s661 = sld [smem:[#allocation5 + %s660]]
  %s662 = scalar_lea.vmem %s1, %s661
  %s663 = scalar_lea.vmem [#allocation2], 13
  %s664 = scalar_lea.sflag [#allocation3], 13
  %p666 = scmp.lt.u32.totalorder 1, 8
  %p667 = pneg %p666
  // Predicated region
  $region408: #{tpu_custom_call.1} parent=0 // pred_check
    _
  $region409: #{tpu_custom_call.1} parent=0 // pred_check_branch
    %669 = sbr.rel (%p666) target = $region411
  $region410: #{tpu_custom_call.1} parent=0 // pred_region
    %s684 = sand.u32 1, 7
    %p685 = scmp.eq.s32.totalorder %s684, 0
    %p686 = pneg %p685
    // Predicated region
    $region423: #{tpu_custom_call.1} parent=410 // pred_check
      _
    $region424: #{tpu_custom_call.1} parent=410 // pred_check_branch
      %688 = sbr.rel (%p685) target = $region426
    $region425: #{tpu_custom_call.1} parent=410 // pred_region
      %s689 = sand.u32 1, 7
      %s690 = ssub.s32 1, %s689
      %s691 = scalar_lea.vmem %s662, %s690
      %s692 = ssub.s32 1, %s689
      %s693 = scalar_lea.vmem %s663, %s692 [#allocation2]
      %s694 = sshllo.u32 0, %s689
      loop: start=0, step=1, limit=1
      $region427: #{tpu_custom_call.1} parent=425 // loop_pre_header
        _
      $region428: #{tpu_custom_call.1} parent=425 // loop_header
        %s696 = sphi 0, %s700
        %p697 = scmp.ge.s32.totalorder %s696, 1
        %s701 = sphi %s691, %s691
        %s702 = sphi %s693, %s693
      $region429: #{tpu_custom_call.1} parent=425 // loop_header_branch
        %699 = sbr.rel (%p697) target = $region433
      $region430: #{tpu_custom_call.1} parent=425 // loop_body
        %v703 = vld [vmem:[%s701] sm:%s694]
        %704 = vst [vmem:[%s702] sm:%s694] %v703
      $region431: #{tpu_custom_call.1} parent=425 // loop_footer
        %s700 = sadd.s32 1, %s696
      $region432: #{tpu_custom_call.1} parent=425 // loop_footer_branch
        %695 = sbr.rel target = $region428
      $region433: #{tpu_custom_call.1} parent=425 // loop_exit
        _
    $region426: #{tpu_custom_call.1} parent=410 // pred_fallthru
      _
  $region411: #{tpu_custom_call.1} parent=0 // pred_fallthru
    _
  // Predicated region
  $region412: #{tpu_custom_call.1} parent=0 // pred_check
    %p670 = pneg %p666
  $region413: #{tpu_custom_call.1} parent=0 // pred_check_branch
    %672 = sbr.rel (%p670) target = $region415
  $region414: #{tpu_custom_call.1} parent=0 // pred_region
    %s673 = sshllo.u32 0, 1
    loop: start=0, step=1, limit=1
    $region416: #{tpu_custom_call.1} parent=414 // loop_pre_header
      _
    $region417: #{tpu_custom_call.1} parent=414 // loop_header
      %s675 = sphi 0, %s679
      %p676 = scmp.ge.s32.totalorder %s675, 1
      %s680 = sphi %s662, %s662
      %s681 = sphi %s663, %s663
    $region418: #{tpu_custom_call.1} parent=414 // loop_header_branch
      %678 = sbr.rel (%p676) target = $region422
    $region419: #{tpu_custom_call.1} parent=414 // loop_body
      %v682 = vld [vmem:[%s680] sm:%s673]
      %683 = vst [vmem:[%s681] sm:%s673] %v682
    $region420: #{tpu_custom_call.1} parent=414 // loop_footer
      %s679 = sadd.s32 1, %s675
    $region421: #{tpu_custom_call.1} parent=414 // loop_footer_branch
      %674 = sbr.rel target = $region417
    $region422: #{tpu_custom_call.1} parent=414 // loop_exit
      _
  $region415: #{tpu_custom_call.1} parent=0 // pred_fallthru
    _
  // Predicated region
  $region434: #{tpu_custom_call.1} parent=0 // pred_check
    _
  $region435: #{tpu_custom_call.1} parent=0 // pred_check_branch
    %707 = sbr.rel (0) target = $region437
  $region436: #{tpu_custom_call.1} parent=0 // pred_region
    %708 = vsyncadd %s664, 16
  $region437: #{tpu_custom_call.1} parent=0 // pred_fallthru
    _
  %s709 = sadd.s32 %s25, 14
  %s710 = sld [smem:[#allocation5 + %s709]]
  %s711 = scalar_lea.vmem %s1, %s710
  %s712 = scalar_lea.vmem [#allocation2], 14
  %s713 = scalar_lea.sflag [#allocation3], 14
  %p715 = scmp.lt.u32.totalorder 1, 8
  %p716 = pneg %p715
  // Predicated region
  $region438: #{tpu_custom_call.1} parent=0 // pred_check
    _
  $region439: #{tpu_custom_call.1} parent=0 // pred_check_branch
    %718 = sbr.rel (%p715) target = $region441
  $region440: #{tpu_custom_call.1} parent=0 // pred_region
    %s733 = sand.u32 1, 7
    %p734 = scmp.eq.s32.totalorder %s733, 0
    %p735 = pneg %p734
    // Predicated region
    $region453: #{tpu_custom_call.1} parent=440 // pred_check
      _
    $region454: #{tpu_custom_call.1} parent=440 // pred_check_branch
      %737 = sbr.rel (%p734) target = $region456
    $region455: #{tpu_custom_call.1} parent=440 // pred_region
      %s738 = sand.u32 1, 7
      %s739 = ssub.s32 1, %s738
      %s740 = scalar_lea.vmem %s711, %s739
      %s741 = ssub.s32 1, %s738
      %s742 = scalar_lea.vmem %s712, %s741 [#allocation2]
      %s743 = sshllo.u32 0, %s738
      loop: start=0, step=1, limit=1
      $region457: #{tpu_custom_call.1} parent=455 // loop_pre_header
        _
      $region458: #{tpu_custom_call.1} parent=455 // loop_header
        %s745 = sphi 0, %s749
        %p746 = scmp.ge.s32.totalorder %s745, 1
        %s750 = sphi %s740, %s740
        %s751 = sphi %s742, %s742
      $region459: #{tpu_custom_call.1} parent=455 // loop_header_branch
        %748 = sbr.rel (%p746) target = $region463
      $region460: #{tpu_custom_call.1} parent=455 // loop_body
        %v752 = vld [vmem:[%s750] sm:%s743]
        %753 = vst [vmem:[%s751] sm:%s743] %v752
      $region461: #{tpu_custom_call.1} parent=455 // loop_footer
        %s749 = sadd.s32 1, %s745
      $region462: #{tpu_custom_call.1} parent=455 // loop_footer_branch
        %744 = sbr.rel target = $region458
      $region463: #{tpu_custom_call.1} parent=455 // loop_exit
        _
    $region456: #{tpu_custom_call.1} parent=440 // pred_fallthru
      _
  $region441: #{tpu_custom_call.1} parent=0 // pred_fallthru
    _
  // Predicated region
  $region442: #{tpu_custom_call.1} parent=0 // pred_check
    %p719 = pneg %p715
  $region443: #{tpu_custom_call.1} parent=0 // pred_check_branch
    %721 = sbr.rel (%p719) target = $region445
  $region444: #{tpu_custom_call.1} parent=0 // pred_region
    %s722 = sshllo.u32 0, 1
    loop: start=0, step=1, limit=1
    $region446: #{tpu_custom_call.1} parent=444 // loop_pre_header
      _
    $region447: #{tpu_custom_call.1} parent=444 // loop_header
      %s724 = sphi 0, %s728
      %p725 = scmp.ge.s32.totalorder %s724, 1
      %s729 = sphi %s711, %s711
      %s730 = sphi %s712, %s712
    $region448: #{tpu_custom_call.1} parent=444 // loop_header_branch
      %727 = sbr.rel (%p725) target = $region452
    $region449: #{tpu_custom_call.1} parent=444 // loop_body
      %v731 = vld [vmem:[%s729] sm:%s722]
      %732 = vst [vmem:[%s730] sm:%s722] %v731
    $region450: #{tpu_custom_call.1} parent=444 // loop_footer
      %s728 = sadd.s32 1, %s724
    $region451: #{tpu_custom_call.1} parent=444 // loop_footer_branch
      %723 = sbr.rel target = $region447
    $region452: #{tpu_custom_call.1} parent=444 // loop_exit
      _
  $region445: #{tpu_custom_call.1} parent=0 // pred_fallthru
    _
  // Predicated region
  $region464: #{tpu_custom_call.1} parent=0 // pred_check
    _
  $region465: #{tpu_custom_call.1} parent=0 // pred_check_branch
    %756 = sbr.rel (0) target = $region467
  $region466: #{tpu_custom_call.1} parent=0 // pred_region
    %757 = vsyncadd %s713, 16
  $region467: #{tpu_custom_call.1} parent=0 // pred_fallthru
    _
  %s758 = sadd.s32 %s25, 15
  %s759 = sld [smem:[#allocation5 + %s758]]
  %s760 = scalar_lea.vmem %s1, %s759
  %s761 = scalar_lea.vmem [#allocation2], 15
  %s762 = scalar_lea.sflag [#allocation3], 15
  %p764 = scmp.lt.u32.totalorder 1, 8
  %p765 = pneg %p764
  // Predicated region
  $region468: #{tpu_custom_call.1} parent=0 // pred_check
    _
  $region469: #{tpu_custom_call.1} parent=0 // pred_check_branch
    %767 = sbr.rel (%p764) target = $region471
  $region470: #{tpu_custom_call.1} parent=0 // pred_region
    %s782 = sand.u32 1, 7
    %p783 = scmp.eq.s32.totalorder %s782, 0
    %p784 = pneg %p783
    // Predicated region
    $region483: #{tpu_custom_call.1} parent=470 // pred_check
      _
    $region484: #{tpu_custom_call.1} parent=470 // pred_check_branch
      %786 = sbr.rel (%p783) target = $region486
    $region485: #{tpu_custom_call.1} parent=470 // pred_region
      %s787 = sand.u32 1, 7
      %s788 = ssub.s32 1, %s787
      %s789 = scalar_lea.vmem %s760, %s788
      %s790 = ssub.s32 1, %s787
      %s791 = scalar_lea.vmem %s761, %s790 [#allocation2]
      %s792 = sshllo.u32 0, %s787
      loop: start=0, step=1, limit=1
      $region487: #{tpu_custom_call.1} parent=485 // loop_pre_header
        _
      $region488: #{tpu_custom_call.1} parent=485 // loop_header
        %s794 = sphi 0, %s798
        %p795 = scmp.ge.s32.totalorder %s794, 1
        %s799 = sphi %s789, %s789
        %s800 = sphi %s791, %s791
      $region489: #{tpu_custom_call.1} parent=485 // loop_header_branch
        %797 = sbr.rel (%p795) target = $region493
      $region490: #{tpu_custom_call.1} parent=485 // loop_body
        %v801 = vld [vmem:[%s799] sm:%s792]
        %802 = vst [vmem:[%s800] sm:%s792] %v801
      $region491: #{tpu_custom_call.1} parent=485 // loop_footer
        %s798 = sadd.s32 1, %s794
      $region492: #{tpu_custom_call.1} parent=485 // loop_footer_branch
        %793 = sbr.rel target = $region488
      $region493: #{tpu_custom_call.1} parent=485 // loop_exit
        _
    $region486: #{tpu_custom_call.1} parent=470 // pred_fallthru
      _
  $region471: #{tpu_custom_call.1} parent=0 // pred_fallthru
    _
  // Predicated region
  $region472: #{tpu_custom_call.1} parent=0 // pred_check
    %p768 = pneg %p764
  $region473: #{tpu_custom_call.1} parent=0 // pred_check_branch
    %770 = sbr.rel (%p768) target = $region475
  $region474: #{tpu_custom_call.1} parent=0 // pred_region
    %s771 = sshllo.u32 0, 1
    loop: start=0, step=1, limit=1
    $region476: #{tpu_custom_call.1} parent=474 // loop_pre_header
      _
    $region477: #{tpu_custom_call.1} parent=474 // loop_header
      %s773 = sphi 0, %s777
      %p774 = scmp.ge.s32.totalorder %s773, 1
      %s778 = sphi %s760, %s760
      %s779 = sphi %s761, %s761
    $region478: #{tpu_custom_call.1} parent=474 // loop_header_branch
      %776 = sbr.rel (%p774) target = $region482
    $region479: #{tpu_custom_call.1} parent=474 // loop_body
      %v780 = vld [vmem:[%s778] sm:%s771]
      %781 = vst [vmem:[%s779] sm:%s771] %v780
    $region480: #{tpu_custom_call.1} parent=474 // loop_footer
      %s777 = sadd.s32 1, %s773
    $region481: #{tpu_custom_call.1} parent=474 // loop_footer_branch
      %772 = sbr.rel target = $region477
    $region482: #{tpu_custom_call.1} parent=474 // loop_exit
      _
  $region475: #{tpu_custom_call.1} parent=0 // pred_fallthru
    _
  // Predicated region
  $region494: #{tpu_custom_call.1} parent=0 // pred_check
    _
  $region495: #{tpu_custom_call.1} parent=0 // pred_check_branch
    %805 = sbr.rel (0) target = $region497
  $region496: #{tpu_custom_call.1} parent=0 // pred_region
    %806 = vsyncadd %s762, 16
  $region497: #{tpu_custom_call.1} parent=0 // pred_fallthru
    _
  %s807 = smul.u32 1, 1
  %s808 = sshll.u32 %s807, 4
  %809 = dma.done [#allocation3], %s808
  %s810 = sshll.u32 %s807, 4
  %811 = dma.done %s76, %s810
  %s812 = sshll.u32 %s807, 4
  %813 = dma.done %s125, %s812
  %s814 = sshll.u32 %s807, 4
  %815 = dma.done %s174, %s814
  %s816 = sshll.u32 %s807, 4
  %817 = dma.done %s223, %s816
  %s818 = sshll.u32 %s807, 4
  %819 = dma.done %s272, %s818
  %s820 = sshll.u32 %s807, 4
  %821 = dma.done %s321, %s820
  %s822 = sshll.u32 %s807, 4
  %823 = dma.done %s370, %s822
  %s824 = sshll.u32 %s807, 4
  %825 = dma.done %s419, %s824
  %s826 = sshll.u32 %s807, 4
  %827 = dma.done %s468, %s826
  %s828 = sshll.u32 %s807, 4
  %829 = dma.done %s517, %s828
  %s830 = sshll.u32 %s807, 4
  %831 = dma.done %s566, %s830
  %s832 = sshll.u32 %s807, 4
  %833 = dma.done %s615, %s832
  %s834 = sshll.u32 %s807, 4
  %835 = dma.done %s664, %s834
  %s836 = sshll.u32 %s807, 4
  %837 = dma.done %s713, %s836
  %s838 = sshll.u32 %s807, 4
  %839 = dma.done %s762, %s838
  %v840 = vld [vmem:[#allocation2] sm:$0xff]
  %v841 = vld [vmem:[#allocation2 + $0x8] sm:$0xff]
  %v842 = vld [vmem:[%s2] sm:$0xff]
  %v843 = vld [vmem:[%s2 + $0x8] sm:$0xff]
  %v844 = vld [vmem:[%s3] sm:$0xff]
  %v845 = vld [vmem:[%s3 + $0x8] sm:$0xff]
  %v846 = vmul.f32 %v840, %v840
  %v847 = vmul.f32 %v841, %v841
  %vm848 = vcmask 261120
  %v849 = vsel %vm848, %v846, 0.0
  %850 = vadd.xlane.f32.xlu0 %v849
  %v851 = vpop.xlane.xlu0 %850
  %v852 = vsel %vm848, %v847, 0.0
  %853 = vadd.xlane.f32.xlu0 %v852
  %v854 = vpop.xlane.xlu0 %853
  %v855 = vmax.f32 %v851, 1e-24
  %v856 = vmax.f32 %v854, 1e-24
  %v857 = vrsqrt.pop %v855
  %v858 = vrsqrt.pop %v856
  %v859 = vmul.f32 %v857, 5.1810584
  %v860 = vmul.f32 %v858, 5.1810584
  %v861 = vmul.f32 %v840, %v859
  %v862 = vmul.f32 %v841, %v860
  %v863 = vld [vmem:[%s4] sm:$0xff]
  %v864 = vld [vmem:[%s4 + $0x8] sm:$0xff]
  %v865 = vld [vmem:[%s4 + $0x10] sm:$0xff]
  %v866 = vld [vmem:[%s4 + $0x18] sm:$0xff]
  %v867 = vld [vmem:[%s5] sm:$0x1]
  %v869 = vlaneseq
  %v870 = vshrl.u32 %v869, 7
  %v871 = vsub.s32 0, %v870
  %v872 = vrot.slane %v867, %v871
  %v875 = vsel %vm848, %v861, 0
  %v878 = vsel %vm848, %v862, 0
  %880 = vmatprep.subr.mxu0 0.0
  %881 = vmatpush1.msra.mxu0 %v863
  %882 = vmatprep.subr.mxu0 0.0
  %883 = vmatpush1.msra.mxu0 %v864
  %884 = vmatprep.subr.mxu0 0.0
  %885 = vmatpush1.msra.mxu0 %v865
  %886 = vmatprep.subr.mxu0 0.0
  %887 = vmatpush1.msra.mxu0 %v866
  %888 = vmatprep.subr.mxu0 0.0
  %889 = vmatpush1.msra.mxu0 0.0
  %890 = vmatprep.subr.mxu0 0.0
  %891 = vmatpush1.msra.mxu0 0.0
  %892 = vmatprep.subr.mxu0 0.0
  %893 = vmatpush1.msra.mxu0 0.0
  %894 = vmatprep.subr.mxu0 0.0
  %895 = vmatpush1.msra.mxu0 0.0
  %896 = vmatprep.subr.mxu0 0.0
  %897 = vmatpush1.msra.mxu0 0.0
  %898 = vmatprep.subr.mxu0 0.0
  %899 = vmatpush1.msra.mxu0 0.0
  %900 = vmatprep.subr.mxu0 0.0
  %901 = vmatpush1.msra.mxu0 0.0
  %902 = vmatprep.subr.mxu0 0.0
  %903 = vmatpush1.msra.mxu0 0.0
  %904 = vmatprep.subr.mxu0 0.0
  %905 = vmatpush1.msra.mxu0 0.0
  %906 = vmatprep.subr.mxu0 0.0
  %907 = vmatpush1.msra.mxu0 0.0
  %908 = vmatprep.subr.mxu0 0.0
  %909 = vmatpush1.msra.mxu0 0.0
  %910 = vmatprep.subr.mxu0 0.0
  %911 = vmatpush1.msra.mxu0 0.0
  %912 = vmatprep.subr.mxu0 0.0
  %913 = vmatpush1.msra.mxu0 0.0
  %914 = vmatprep.subr.mxu0 0.0
  %915 = vmatpush1.msra.mxu0 0.0
  %916 = vmatprep.subr.mxu0 0.0
  %917 = vmatpush1.msra.mxu0 0.0
  %918 = vmatprep.subr.mxu0 0.0
  %919 = vmatpush1.msra.mxu0 0.0
  %920 = vmatprep.subr.mxu0 0.0
  %921 = vmatpush1.msra.mxu0 0.0
  %922 = vmatprep.subr.mxu0 0.0
  %923 = vmatpush1.msra.mxu0 0.0
  %924 = vmatprep.subr.mxu0 0.0
  %925 = vmatpush1.msra.mxu0 0.0
  %926 = vmatprep.subr.mxu0 0.0
  %927 = vmatpush1.msra.mxu0 0.0
  %928 = vmatprep.subr.mxu0 0.0
  %929 = vmatpush1.msra.mxu0 0.0
  %930 = vmatprep.subr.mxu0 0.0
  %931 = vmatpush1.msra.mxu0 0.0
  %932 = vmatprep.subr.mxu0 0.0
  %933 = vmatpush1.msra.mxu0 0.0
  %934 = vmatprep.subr.mxu0 0.0
  %935 = vmatpush1.msra.mxu0 0.0
  %936 = vmatprep.subr.mxu0 0.0
  %937 = vmatpush1.msra.mxu0 0.0
  %938 = vmatprep.subr.mxu0 0.0
  %939 = vmatpush1.msra.mxu0 0.0
  %940 = vmatprep.subr.mxu0 0.0
  %941 = vmatpush1.msra.mxu0 0.0
  %942 = vmatprep.subr.mxu0 0.0
  %943 = vmatpush1.msra.mxu0 0.0
  %944 = vmatprep.mubr.f32.mxu0 0.0
  %945 = vmatmul.mubr.f32.gmra.mrb[0].mxu0 %v875
  %v946 = vpop.f32.mrb[0].mxu0
  %v947 = vadd.f32 %v872, %v946
  %v948 = vpop.f32.mrb[0].mxu0
  %949 = vmatprep.mubr.f32.mxu0 0.0
  %950 = vmatmul.mubr.f32.gmra.mrb[0].mxu0 %v878
  %v951 = vpop.f32.mrb[0].mxu0
  %v952 = vadd.f32 %v872, %v951
  %v953 = vpop.f32.mrb[0].mxu0
  %954 = vdwg.mxu0
  %vm955 = vcmask 326656
  %v956 = vsel %vm955, %v947, -inf
  %957 = vmax.xlane.f32.xlu0 %v956
  %v958 = vpop.xlane.xlu0 %957
  %v959 = vsel %vm955, %v952, -inf
  %960 = vmax.xlane.f32.xlu0 %v959
  %v961 = vpop.xlane.xlu0 %960
  %v962 = vsub.f32 -inf, %v958
  %v963 = vsub.f32 -inf, %v961
  %v964 = vmul.f32 %v962, 1.442695
  %v965 = vpow.pop %v964
  %v966 = vmul.f32 %v963, 1.442695
  %v967 = vpow.pop %v966
  %v968 = vmul.f32 %v965, 0.0
  %v969 = vmul.f32 %v967, 0.0
  %v970 = vsub.f32 %v947, %v958
  %v971 = vsub.f32 %v952, %v961
  %v972 = vmul.f32 %v970, 1.442695
  %v973 = vpow.pop %v972
  %v974 = vmul.f32 %v971, 1.442695
  %v975 = vpow.pop %v974
  %v976 = vsel %vm955, %v973, 0.0
  %977 = vadd.xlane.f32.xlu0 %v976
  %v978 = vpop.xlane.xlu0 %977
  %v979 = vsel %vm955, %v975, 0.0
  %980 = vadd.xlane.f32.xlu0 %v979
  %v981 = vpop.xlane.xlu0 %980
  %v982 = vadd.f32 %v968, %v978
  %v983 = vadd.f32 %v969, %v981
  %v984 = vlaneseq
  %v985 = vand.u32 %v984, 127
  %986 = vset.pattern.permute.xlu0 0
  %987 = vperm.xlu0 %986, %v844
  %v988 = vpop.permute.xlu0 %987
  %989 = vset.pattern.permute.xlu0 0
  %990 = vperm.xlu0 %989, %v845
  %v991 = vpop.permute.xlu0 %990
  %vm992 = vcmp.eq.s32.totalorder %v985, %v988
  %vm993 = vcmp.eq.s32.totalorder %v985, %v991
  %v994 = vsel %vm992, %v947, 0.0
  %v995 = vsel %vm993, %v952, 0.0
  %v996 = vsel %vm955, %v994, 0.0
  %997 = vadd.xlane.f32.xlu0 %v996
  %v998 = vpop.xlane.xlu0 %997
  %v999 = vsel %vm955, %v995, 0.0
  %1000 = vadd.xlane.f32.xlu0 %v999
  %v1001 = vpop.xlane.xlu0 %1000
  %v1002 = vadd.f32 %v998, 0.0
  %v1003 = vadd.f32 %v1001, 0.0
  %v1004 = vlog2.pop %v982
  %v1005 = vmul.f32 %v1004, 0.6931472
  %v1006 = vlog2.pop %v983
  %v1007 = vmul.f32 %v1006, 0.6931472
  %v1008 = vadd.f32 %v958, %v1005
  %v1009 = vadd.f32 %v961, %v1007
  %v1010 = vsub.f32 %v1008, %v1002
  %v1011 = vsub.f32 %v1009, %v1003
  %vm1012 = vcmp.gt.f32.partialorder %v842, 0.0
  %vm1013 = vcmp.gt.f32.partialorder %v843, 0.0
  %vm1014 = vcmp.ge.s32.totalorder %v844, 0
  %vm1015 = vcmp.ge.s32.totalorder %v845, 0
  %vm1016 = vmand %vm1012, %vm1014
  %vm1017 = vmand %vm1013, %vm1015
  %v1018 = vsel %vm1016, 1, 0
  %v1019 = vsel %vm1017, 1, 0
  %v1020 = vcvt.s32.f32 %v1018
  %v1021 = vcvt.s32.f32 %v1019
  %v1022 = vmul.f32 %v1010, %v1020
  %v1023 = vmul.f32 %v1011, %v1021
  %vm1024 = vcmask 7168
  %1025 = vst.msk [vmem:[%s6] sm:$0xff] %vm1024, %v1022
  %1026 = vst.msk [vmem:[%s6 + $0x8] sm:$0xff] %vm1024, %v1023
  %1029 = vrot.lane.b32.xlu0 %v1020, 1
  %v1030 = vpop.permute.xlu0 %1029
  %1031 = vrot.lane.b32.xlu0 %v1021, 1
  %v1032 = vpop.permute.xlu0 %1031
  %vm1035 = vcmask 15368
  %1036 = vst.msk [vmem:[%s6] sm:$0xff] %vm1035, %v1030
  %1037 = vst.msk [vmem:[%s6 + $0x8] sm:$0xff] %vm1035, %v1032
  // Predicated region
  $region498: #{tpu_custom_call.1} parent=0 // pred_check
    _
  $region499: #{tpu_custom_call.1} parent=0 // pred_check_branch
    %1039 = sbr.rel (0) target = $region501
  $region500: #{tpu_custom_call.1} parent=0 // pred_region
    _
  $region501: #{tpu_custom_call.1} parent=0 // pred_fallthru
    _
  // Predicated region
  $region502: #{tpu_custom_call.1} parent=0 // pred_check
    _
  $region503: #{tpu_custom_call.1} parent=0 // pred_check_branch
    %1041 = sbr.rel (0) target = $region505
  $region504: #{tpu_custom_call.1} parent=0 // pred_region
    _
  $region505: #{tpu_custom_call.1} parent=0 // pred_fallthru
    _
  %1042 = vsyncmov [#allocation3]
  %s1043 = vpop.sfrf %1042
  %p1044 = scmp.eq.s32.totalorder %s1043, 0
  %p1045 = pneg %p1044
  %1047 = shalt.err (%p1045)
  %s1048 = scalar_lea.sflag [#allocation3], 1
  %1049 = vsyncmov %s1048
  %s1050 = vpop.sfrf %1049
  %p1051 = scmp.eq.s32.totalorder %s1050, 0
  %p1052 = pneg %p1051
  %1054 = shalt.err (%p1052)
  %s1055 = scalar_lea.sflag [#allocation3], 2
  %1056 = vsyncmov %s1055
  %s1057 = vpop.sfrf %1056
  %p1058 = scmp.eq.s32.totalorder %s1057, 0
  %p1059 = pneg %p1058
  %1061 = shalt.err (%p1059)
  %s1062 = scalar_lea.sflag [#allocation3], 3
  %1063 = vsyncmov %s1062
  %s1064 = vpop.sfrf %1063
  %p1065 = scmp.eq.s32.totalorder %s1064, 0
  %p1066 = pneg %p1065
  %1068 = shalt.err (%p1066)
  %s1069 = scalar_lea.sflag [#allocation3], 4
  %1070 = vsyncmov %s1069
  %s1071 = vpop.sfrf %1070
  %p1072 = scmp.eq.s32.totalorder %s1071, 0
  %p1073 = pneg %p1072
  %1075 = shalt.err (%p1073)
  %s1076 = scalar_lea.sflag [#allocation3], 5
  %1077 = vsyncmov %s1076
  %s1078 = vpop.sfrf %1077
  %p1079 = scmp.eq.s32.totalorder %s1078, 0
  %p1080 = pneg %p1079
  %1082 = shalt.err (%p1080)
  %s1083 = scalar_lea.sflag [#allocation3], 6
  %1084 = vsyncmov %s1083
  %s1085 = vpop.sfrf %1084
  %p1086 = scmp.eq.s32.totalorder %s1085, 0
  %p1087 = pneg %p1086
  %1089 = shalt.err (%p1087)
  %s1090 = scalar_lea.sflag [#allocation3], 7
  %1091 = vsyncmov %s1090
  %s1092 = vpop.sfrf %1091
  %p1093 = scmp.eq.s32.totalorder %s1092, 0
  %p1094 = pneg %p1093
  %1096 = shalt.err (%p1094)
  %s1097 = scalar_lea.sflag [#allocation3], 8
  %1098 = vsyncmov %s1097
  %s1099 = vpop.sfrf %1098
  %p1100 = scmp.eq.s32.totalorder %s1099, 0
  %p1101 = pneg %p1100
  %1103 = shalt.err (%p1101)
  %s1104 = scalar_lea.sflag [#allocation3], 9
  %1105 = vsyncmov %s1104
  %s1106 = vpop.sfrf %1105
  %p1107 = scmp.eq.s32.totalorder %s1106, 0
  %p1108 = pneg %p1107
  %1110 = shalt.err (%p1108)
  %s1111 = scalar_lea.sflag [#allocation3], 10
  %1112 = vsyncmov %s1111
  %s1113 = vpop.sfrf %1112
  %p1114 = scmp.eq.s32.totalorder %s1113, 0
  %p1115 = pneg %p1114
  %1117 = shalt.err (%p1115)
  %s1118 = scalar_lea.sflag [#allocation3], 11
  %1119 = vsyncmov %s1118
  %s1120 = vpop.sfrf %1119
  %p1121 = scmp.eq.s32.totalorder %s1120, 0
  %p1122 = pneg %p1121
  %1124 = shalt.err (%p1122)
  %s1125 = scalar_lea.sflag [#allocation3], 12
  %1126 = vsyncmov %s1125
  %s1127 = vpop.sfrf %1126
  %p1128 = scmp.eq.s32.totalorder %s1127, 0
  %p1129 = pneg %p1128
  %1131 = shalt.err (%p1129)
  %s1132 = scalar_lea.sflag [#allocation3], 13
  %1133 = vsyncmov %s1132
  %s1134 = vpop.sfrf %1133
  %p1135 = scmp.eq.s32.totalorder %s1134, 0
  %p1136 = pneg %p1135
  %1138 = shalt.err (%p1136)
  %s1139 = scalar_lea.sflag [#allocation3], 14
  %1140 = vsyncmov %s1139
  %s1141 = vpop.sfrf %1140
  %p1142 = scmp.eq.s32.totalorder %s1141, 0
  %p1143 = pneg %p1142
  %1145 = shalt.err (%p1143)
  %s1146 = scalar_lea.sflag [#allocation3], 15
  %1147 = vsyncmov %s1146
  %s1148 = vpop.sfrf %1147
  %p1149 = scmp.eq.s32.totalorder %s1148, 0
  %p1150 = pneg %p1149
  %1152 = shalt.err (%p1150)

</llo_original>
